<compile_context>
chip_gen: v5e
topology: v5e:2x2
jax: 0.10.0
libtpu: 0.0.40
codegen_flags: <defaults>
</compile_context>

<pallas_src>
import functools

import jax
import jax.numpy as jnp
from jax import lax
from jax.experimental import pallas as pl
from jax.experimental.pallas import tpu as pltpu

EPS = 1e-5


def _bn(y, gamma, beta):
    # Training-mode BatchNorm over the lane (pixel) axis of a (C, P) activation,
    # folded to a per-channel affine.  Full-width VPU ops: y*y, y*scale, +shift;
    # rsqrt goes to the EUP and the (C,1) column math is negligible.
    mean = jnp.mean(y, axis=1, keepdims=True)
    var = jnp.mean(y * y, axis=1, keepdims=True) - mean * mean
    scale = gamma * lax.rsqrt(var + EPS)
    shift = beta - mean * scale
    return y * scale + shift


def conv_bn_relu_kernel(x_ref, w1_ref, g1_ref, b1_ref,
                        w2_ref, g2_ref, b2_ref,
                        w3_ref, g3_ref, b3_ref,
                        mask_ref, out_ref, col_ref, *, H, W):
    n = w1_ref.shape[0]
    P = x_ref.shape[1]
    mxu = w1_ref.dtype                     # MXU operand dtype (bf16 by default)

    # --- conv_reduce (1x1, no bias) + bn_reduce + ReLU -----------------------
    # x_ref is read here and re-read at the residual add (not held live).
    y1 = jnp.dot(w1_ref[...], x_ref[...].astype(mxu),
                 preferred_element_type=jnp.float32)
    o1 = jnp.maximum(_bn(y1, g1_ref[...], b1_ref[...]), 0.0)        # (n, P) f32

    # --- CDilated: 3x3, stride 1, dilation 2, padding 2 (same spatial size) --
    # im2col on the lane axis: tap (dy, dx) is a lane roll of o1 by dy*W + dx,
    # multiplied by a precomputed 0/1 validity mask (zero padding).  Each tap
    # is written straight into the VMEM `col` scratch (no concat temporary).
    k = 0
    for dy in (-2, 0, 2):                                           # ky = 0,1,2
        for dx in (-2, 0, 2):                                       # kx = 0,1,2
            shift = dy * W + dx
            t = o1 if shift == 0 else pltpu.roll(o1, (-shift) % P, axis=1)
            if not (dy == 0 and dx == 0):                # center tap: all valid
                t = t * mask_ref[k:k + 1, :]
            col_ref[k * n:(k + 1) * n, :] = t.astype(col_ref.dtype)
            k += 1

    y2 = jnp.dot(w2_ref[...], col_ref[...], preferred_element_type=jnp.float32)
    o2 = jnp.maximum(_bn(y2, g2_ref[...], b2_ref[...]), 0.0)        # (n, P) f32

    # --- conv_expend (1x1, no bias) + bn_expend + residual add + ReLU --------
    y3 = jnp.dot(w3_ref[...], o2.astype(mxu), preferred_element_type=jnp.float32)
    y3 = _bn(y3, g3_ref[...], b3_ref[...])
    out_ref[...] = jnp.maximum(y3 + x_ref[...], 0.0)                # (Cout, P)


def _vmem_limit_bytes():
    # Generation-aware VMEM request: ~75% of physical, capped.
    # v7x (64 MiB physical) -> 48 MiB; v5e/v6e (128 MiB) -> 96 MiB.
    try:
        cap = int(pltpu.get_tpu_info().vmem_capacity_bytes)
    except Exception:
        cap = 64 * 1024 * 1024
    return min((cap * 3) // 4, 112 * 1024 * 1024)


def make_tap_masks(N, H, W):
    # (9, P) 0/1 masks, one row per (dy, dx) tap of the dilation-2 3x3 conv,
    # precomputed once so the kernel does no integer div/mod or compares.
    P = N * H * W
    p = jnp.arange(P, dtype=jnp.int32)
    wi = p % W
    hi = (p // W) % H
    rows = []
    for dy in (-2, 0, 2):
        for dx in (-2, 0, 2):
            rows.append((hi + dy >= 0) & (hi + dy < H)
                        & (wi + dx >= 0) & (wi + dx < W))
    return jnp.stack(rows, axis=0).astype(jnp.float32)


def conv_bn_relu_cp(x_cp, kparams, masks, *, H, W, matmul_dtype=jnp.bfloat16):
    # Runs the fused block on activations already in the (C, P) kernel layout,
    # so stacked blocks (encode2..encode11 of Model) pay no per-block transpose.
    Cin, P = x_cp.shape
    w1, g1, b1, w2, g2, b2, w3, g3, b3 = kparams
    n = w1.shape[0]
    Cout = w3.shape[0]
    w1m = w1.astype(matmul_dtype)
    w2m = w2.astype(matmul_dtype)
    w3m = w3.astype(matmul_dtype)
    kernel = functools.partial(conv_bn_relu_kernel, H=H, W=W)
    vmem_spec = pl.BlockSpec(memory_space=pltpu.MemorySpace.VMEM)
    return pl.pallas_call(
        kernel,
        out_shape=jax.ShapeDtypeStruct((Cout, P), jnp.float32),
        in_specs=[vmem_spec] * 11,
        out_specs=vmem_spec,
        scratch_shapes=[pltpu.VMEM((9 * n, P), matmul_dtype)],
        compiler_params=pltpu.CompilerParams(
            vmem_limit_bytes=_vmem_limit_bytes()),
    )(x_cp, w1m, g1, b1, w2m, g2, b2, w3m, g3, b3, masks)


def conv_bn_relu_forward(x_nchw, kparams, *, matmul_dtype=jnp.bfloat16):
    # NCHW boundary wrapper: one re-layout in, one out (only at graph edges).
    N, Cin, H, W = x_nchw.shape
    P = N * H * W
    assert P % 128 == 0, "N*H*W must be a multiple of 128 (lane axis)"
    x_cp = jnp.transpose(x_nchw, (1, 0, 2, 3)).reshape(Cin, P).astype(jnp.float32)
    masks = make_tap_masks(N, H, W)
    out_cp = conv_bn_relu_cp(x_cp, kparams, masks, H=H, W=W,
                             matmul_dtype=matmul_dtype)
    Cout = out_cp.shape[0]
    return jnp.transpose(out_cp.reshape(Cout, N, H, W), (1, 0, 2, 3))


def init_pt_params(key, in_ch, out_ch):
    # Synthetic parameters in PyTorch layouts (conv weights OIHW, BN per-channel).
    n = out_ch // 2
    ks = jax.random.split(key, 9)
    w1 = jax.random.normal(ks[0], (n, in_ch, 1, 1), jnp.float32) * (2.0 / in_ch) ** 0.5
    w2 = jax.random.normal(ks[1], (n, n, 3, 3), jnp.float32) * (2.0 / (9.0 * n)) ** 0.5
    w3 = jax.random.normal(ks[2], (out_ch, n, 1, 1), jnp.float32) * (2.0 / n) ** 0.5
    g1 = 1.0 + 0.1 * jax.random.normal(ks[3], (n,), jnp.float32)
    b1 = 0.1 * jax.random.normal(ks[4], (n,), jnp.float32)
    g2 = 1.0 + 0.1 * jax.random.normal(ks[5], (n,), jnp.float32)
    b2 = 0.1 * jax.random.normal(ks[6], (n,), jnp.float32)
    g3 = 1.0 + 0.1 * jax.random.normal(ks[7], (out_ch,), jnp.float32)
    b3 = 0.1 * jax.random.normal(ks[8], (out_ch,), jnp.float32)
    return (w1, g1, b1, w2, g2, b2, w3, g3, b3)


def to_kernel_params(pt_params):
    # Convert PyTorch-layout weights to the kernel's (C-major, lane-dense) layouts:
    #   w1: (n, Cin)      w2: (n, 9n) ordered [(ky*3+kx)*n + ci]      w3: (Cout, n)
    #   BN gamma/beta: (C, 1) columns for lane broadcast.
    w1, g1, b1, w2, g2, b2, w3, g3, b3 = pt_params
    n, in_ch = w1.shape[0], w1.shape[1]
    out_ch = w3.shape[0]
    w1k = w1.reshape(n, in_ch)
    w2k = jnp.transpose(w2, (0, 2, 3, 1)).reshape(n, 9 * n)
    w3k = w3.reshape(out_ch, n)
    col = lambda v: v.reshape(-1, 1)
    return (w1k, col(g1), col(b1), w2k, col(g2), col(b2), w3k, col(g3), col(b3))


def reference_forward(x, pt_params, conv_dtype=jnp.float32):
    # Pure-JAX NCHW reference (training-mode BN, f32 accumulation).  With
    # conv_dtype=bf16 the conv operands are bf16-cast like the kernel's MXU path.
    w1, g1, b1, w2, g2, b2, w3, g3, b3 = pt_params

    def bn(y, g, b):
        mean = jnp.mean(y, axis=(0, 2, 3), keepdims=True)
        var = jnp.mean(jnp.square(y - mean), axis=(0, 2, 3), keepdims=True)
        return ((y - mean) * lax.rsqrt(var + EPS) * g.reshape(1, -1, 1, 1)
                + b.reshape(1, -1, 1, 1))

    dn = ('NCHW', 'OIHW', 'NCHW')
    prec = lax.Precision.HIGHEST if conv_dtype == jnp.float32 else None

    def conv(lhs, rhs, padding, rhs_dilation=None):
        return lax.conv_general_dilated(
            lhs.astype(conv_dtype), rhs.astype(conv_dtype), (1, 1), padding,
            rhs_dilation=rhs_dilation, dimension_numbers=dn,
            preferred_element_type=jnp.float32, precision=prec)

    y1 = conv(x, w1, 'VALID')
    o1 = jnp.maximum(bn(y1, g1, b1), 0.0)
    y2 = conv(o1, w2, ((2, 2), (2, 2)), rhs_dilation=(2, 2))
    o2 = jnp.maximum(bn(y2, g2, b2), 0.0)
    y3 = conv(o2, w3, 'VALID')
    return jnp.maximum(bn(y3, g3, b3) + x, 0.0)


if __name__ == "__main__":
    key = jax.random.PRNGKey(0)
    kx, kp = jax.random.split(key)

    # Model uses conv_bn_relu(64, 64) stages; residual requires in_ch == out_ch.
    in_ch = out_ch = 64
    N, H, W = 2, 16, 16                                # P = N*H*W = 512 lanes

    x = jax.random.normal(kx, (N, in_ch, H, W), jnp.float32)   # NCHW, as in PyTorch
    pt_params = init_pt_params(kp, in_ch, out_ch)
    kparams = to_kernel_params(pt_params)

    # Performance configuration: bf16 MXU operands, f32 accumulation / BN / ReLU.
    out = conv_bn_relu_forward(x, kparams, matmul_dtype=jnp.bfloat16)
    out = jax.block_until_ready(out)
    assert out.shape == (N, out_ch, H, W)

    # Exact-logic check: f32 matmul operands vs HIGHEST-precision lax.conv reference.
    out_f32 = jax.block_until_ready(
        conv_bn_relu_forward(x, kparams, matmul_dtype=jnp.float32))
    ref_f32 = reference_forward(x, pt_params, conv_dtype=jnp.float32)
    if not bool(jnp.allclose(out_f32, ref_f32, atol=2e-3, rtol=2e-3)):
        err = float(jnp.max(jnp.abs(out_f32 - ref_f32)))
        raise AssertionError(f"f32 kernel mismatches JAX reference (max abs err {err})")

    # bf16-MXU check against a reference that also uses bf16 conv operands.
    ref_bf16 = reference_forward(x, pt_params, conv_dtype=jnp.bfloat16)
    if not bool(jnp.allclose(out, ref_bf16, atol=2e-2, rtol=2e-2)):
        err = float(jnp.max(jnp.abs(out - ref_bf16)))
        raise AssertionError(f"bf16 kernel mismatches bf16 JAX reference (max abs err {err})")

    print("KERNEL_OK")
</pallas_src>

<mosaic_0001>
module attributes {stable_mosaic.version = 11 : i64} {
  func.func @conv_bn_relu_kernel(%arg0: memref<64x512xf32, #tpu.memory_space<vmem>>, %arg1: memref<32x64xbf16, #tpu.memory_space<vmem>>, %arg2: memref<32x1xf32, #tpu.memory_space<vmem>>, %arg3: memref<32x1xf32, #tpu.memory_space<vmem>>, %arg4: memref<32x288xbf16, #tpu.memory_space<vmem>>, %arg5: memref<32x1xf32, #tpu.memory_space<vmem>>, %arg6: memref<32x1xf32, #tpu.memory_space<vmem>>, %arg7: memref<64x32xbf16, #tpu.memory_space<vmem>>, %arg8: memref<64x1xf32, #tpu.memory_space<vmem>>, %arg9: memref<64x1xf32, #tpu.memory_space<vmem>>, %arg10: memref<9x512xf32, #tpu.memory_space<vmem>>, %arg11: memref<64x512xf32, #tpu.memory_space<vmem>>, %arg12: memref<288x512xbf16, #tpu.memory_space<vmem>>) attributes {dimension_semantics = [], scalar_prefetch = 0 : i64, scratch_operands = 1 : i64, tpu.core_type = #tpu.core_type<tc>} {
    %c0 = arith.constant 0 : index
    %c0_0 = arith.constant 0 : index
    %0 = vector.load %arg1[%c0, %c0_0] : memref<32x64xbf16, #tpu.memory_space<vmem>>, vector<32x64xbf16>
    %c0_1 = arith.constant 0 : index
    %c0_2 = arith.constant 0 : index
    %1 = vector.load %arg0[%c0_1, %c0_2] : memref<64x512xf32, #tpu.memory_space<vmem>>, vector<64x512xf32>
    %2 = arith.truncf %1 : vector<64x512xf32> to vector<64x512xbf16>
    %cst = arith.constant dense<0.000000e+00> : vector<32x512xf32>
    %3 = tpu.matmul %0, %2, %cst {dimension_numbers = #tpu.dot_dimension_numbers<[1], [0], [0], [1], [0, 0, 1, 1], [], []>} : vector<32x64xbf16>, vector<64x512xbf16>, vector<32x512xf32> -> vector<32x512xf32>
    %c0_3 = arith.constant 0 : index
    %c0_4 = arith.constant 0 : index
    %4 = vector.load %arg2[%c0_3, %c0_4] : memref<32x1xf32, #tpu.memory_space<vmem>>, vector<32x1xf32>
    %c0_5 = arith.constant 0 : index
    %c0_6 = arith.constant 0 : index
    %5 = vector.load %arg3[%c0_5, %c0_6] : memref<32x1xf32, #tpu.memory_space<vmem>>, vector<32x1xf32>
    %cst_7 = arith.constant dense<0.000000e+00> : vector<32xf32>
    %6 = vector.multi_reduction <add>, %3, %cst_7 [1] : vector<32x512xf32> to vector<32xf32>
    %7 = vector.shape_cast %6 : vector<32xf32> to vector<32x1xf32>
    %cst_8 = arith.constant 5.120000e+02 : f32
    %8 = vector.broadcast %cst_8 : f32 to vector<32x1xf32>
    %9 = arith.divf %7, %8 : vector<32x1xf32>
    %10 = arith.mulf %3, %3 : vector<32x512xf32>
    %cst_9 = arith.constant dense<0.000000e+00> : vector<32xf32>
    %11 = vector.multi_reduction <add>, %10, %cst_9 [1] : vector<32x512xf32> to vector<32xf32>
    %12 = vector.shape_cast %11 : vector<32xf32> to vector<32x1xf32>
    %cst_10 = arith.constant 5.120000e+02 : f32
    %13 = vector.broadcast %cst_10 : f32 to vector<32x1xf32>
    %14 = arith.divf %12, %13 : vector<32x1xf32>
    %15 = arith.mulf %9, %9 : vector<32x1xf32>
    %16 = arith.subf %14, %15 : vector<32x1xf32>
    %cst_11 = arith.constant 9.99999974E-6 : f32
    %17 = vector.broadcast %cst_11 : f32 to vector<32x1xf32>
    %18 = arith.addf %16, %17 : vector<32x1xf32>
    %19 = math.rsqrt %18 : vector<32x1xf32>
    %20 = arith.mulf %4, %19 : vector<32x1xf32>
    %21 = arith.mulf %9, %20 : vector<32x1xf32>
    %22 = arith.subf %5, %21 : vector<32x1xf32>
    %23 = vector.broadcast %20 : vector<32x1xf32> to vector<32x512xf32>
    %24 = arith.mulf %3, %23 : vector<32x512xf32>
    %25 = vector.broadcast %22 : vector<32x1xf32> to vector<32x512xf32>
    %26 = arith.addf %24, %25 : vector<32x512xf32>
    %cst_12 = arith.constant 0.000000e+00 : f32
    %27 = vector.broadcast %cst_12 : f32 to vector<32x512xf32>
    %28 = arith.maximumf %26, %27 : vector<32x512xf32>
    %c34_i32 = arith.constant 34 : i32
    %29 = tpu.dynamic_rotate %28 by %c34_i32 dim 1 : vector<32x512xf32>, i32 -> vector<32x512xf32>
    %c0_13 = arith.constant 0 : index
    %c0_14 = arith.constant 0 : index
    %30 = vector.load %arg10[%c0_13, %c0_14] : memref<9x512xf32, #tpu.memory_space<vmem>>, vector<1x512xf32>
    %31 = vector.broadcast %30 : vector<1x512xf32> to vector<32x512xf32>
    %32 = arith.mulf %29, %31 : vector<32x512xf32>
    %33 = arith.truncf %32 : vector<32x512xf32> to vector<32x512xbf16>
    %c0_15 = arith.constant 0 : index
    %c0_16 = arith.constant 0 : index
    %34 = vector.load %arg12[%c0_15, %c0_16] : memref<288x512xbf16, #tpu.memory_space<vmem>>, vector<32x512xbf16>
    tpu.vector_store %arg12[%c0_15, %c0_16], %33 {strides = array<i32>} : memref<288x512xbf16, #tpu.memory_space<vmem>>, vector<32x512xbf16>,
    %c32_i32 = arith.constant 32 : i32
    %35 = tpu.dynamic_rotate %28 by %c32_i32 dim 1 : vector<32x512xf32>, i32 -> vector<32x512xf32>
    %c1 = arith.constant 1 : index
    %c0_17 = arith.constant 0 : index
    %36 = vector.load %arg10[%c1, %c0_17] : memref<9x512xf32, #tpu.memory_space<vmem>>, vector<1x512xf32>
    %37 = vector.broadcast %36 : vector<1x512xf32> to vector<32x512xf32>
    %38 = arith.mulf %35, %37 : vector<32x512xf32>
    %39 = arith.truncf %38 : vector<32x512xf32> to vector<32x512xbf16>
    %c32 = arith.constant 32 : index
    %c0_18 = arith.constant 0 : index
    %40 = vector.load %arg12[%c32, %c0_18] : memref<288x512xbf16, #tpu.memory_space<vmem>>, vector<32x512xbf16>
    tpu.vector_store %arg12[%c32, %c0_18], %39 {strides = array<i32>} : memref<288x512xbf16, #tpu.memory_space<vmem>>, vector<32x512xbf16>,
    %c30_i32 = arith.constant 30 : i32
    %41 = tpu.dynamic_rotate %28 by %c30_i32 dim 1 : vector<32x512xf32>, i32 -> vector<32x512xf32>
    %c2 = arith.constant 2 : index
    %c0_19 = arith.constant 0 : index
    %42 = vector.load %arg10[%c2, %c0_19] : memref<9x512xf32, #tpu.memory_space<vmem>>, vector<1x512xf32>
    %43 = vector.broadcast %42 : vector<1x512xf32> to vector<32x512xf32>
    %44 = arith.mulf %41, %43 : vector<32x512xf32>
    %45 = arith.truncf %44 : vector<32x512xf32> to vector<32x512xbf16>
    %c64 = arith.constant 64 : index
    %c0_20 = arith.constant 0 : index
    %46 = vector.load %arg12[%c64, %c0_20] : memref<288x512xbf16, #tpu.memory_space<vmem>>, vector<32x512xbf16>
    tpu.vector_store %arg12[%c64, %c0_20], %45 {strides = array<i32>} : memref<288x512xbf16, #tpu.memory_space<vmem>>, vector<32x512xbf16>,
    %c2_i32 = arith.constant 2 : i32
    %47 = tpu.dynamic_rotate %28 by %c2_i32 dim 1 : vector<32x512xf32>, i32 -> vector<32x512xf32>
    %c3 = arith.constant 3 : index
    %c0_21 = arith.constant 0 : index
    %48 = vector.load %arg10[%c3, %c0_21] : memref<9x512xf32, #tpu.memory_space<vmem>>, vector<1x512xf32>
    %49 = vector.broadcast %48 : vector<1x512xf32> to vector<32x512xf32>
    %50 = arith.mulf %47, %49 : vector<32x512xf32>
    %51 = arith.truncf %50 : vector<32x512xf32> to vector<32x512xbf16>
    %c96 = arith.constant 96 : index
    %c0_22 = arith.constant 0 : index
    %52 = vector.load %arg12[%c96, %c0_22] : memref<288x512xbf16, #tpu.memory_space<vmem>>, vector<32x512xbf16>
    tpu.vector_store %arg12[%c96, %c0_22], %51 {strides = array<i32>} : memref<288x512xbf16, #tpu.memory_space<vmem>>, vector<32x512xbf16>,
    %53 = arith.truncf %28 : vector<32x512xf32> to vector<32x512xbf16>
    %c128 = arith.constant 128 : index
    %c0_23 = arith.constant 0 : index
    %54 = vector.load %arg12[%c128, %c0_23] : memref<288x512xbf16, #tpu.memory_space<vmem>>, vector<32x512xbf16>
    tpu.vector_store %arg12[%c128, %c0_23], %53 {strides = array<i32>} : memref<288x512xbf16, #tpu.memory_space<vmem>>, vector<32x512xbf16>,
    %c510_i32 = arith.constant 510 : i32
    %55 = tpu.dynamic_rotate %28 by %c510_i32 dim 1 : vector<32x512xf32>, i32 -> vector<32x512xf32>
    %c5 = arith.constant 5 : index
    %c0_24 = arith.constant 0 : index
    %56 = vector.load %arg10[%c5, %c0_24] : memref<9x512xf32, #tpu.memory_space<vmem>>, vector<1x512xf32>
    %57 = vector.broadcast %56 : vector<1x512xf32> to vector<32x512xf32>
    %58 = arith.mulf %55, %57 : vector<32x512xf32>
    %59 = arith.truncf %58 : vector<32x512xf32> to vector<32x512xbf16>
    %c160 = arith.constant 160 : index
    %c0_25 = arith.constant 0 : index
    %60 = vector.load %arg12[%c160, %c0_25] : memref<288x512xbf16, #tpu.memory_space<vmem>>, vector<32x512xbf16>
    tpu.vector_store %arg12[%c160, %c0_25], %59 {strides = array<i32>} : memref<288x512xbf16, #tpu.memory_space<vmem>>, vector<32x512xbf16>,
    %c482_i32 = arith.constant 482 : i32
    %61 = tpu.dynamic_rotate %28 by %c482_i32 dim 1 : vector<32x512xf32>, i32 -> vector<32x512xf32>
    %c6 = arith.constant 6 : index
    %c0_26 = arith.constant 0 : index
    %62 = vector.load %arg10[%c6, %c0_26] : memref<9x512xf32, #tpu.memory_space<vmem>>, vector<1x512xf32>
    %63 = vector.broadcast %62 : vector<1x512xf32> to vector<32x512xf32>
    %64 = arith.mulf %61, %63 : vector<32x512xf32>
    %65 = arith.truncf %64 : vector<32x512xf32> to vector<32x512xbf16>
    %c192 = arith.constant 192 : index
    %c0_27 = arith.constant 0 : index
    %66 = vector.load %arg12[%c192, %c0_27] : memref<288x512xbf16, #tpu.memory_space<vmem>>, vector<32x512xbf16>
    tpu.vector_store %arg12[%c192, %c0_27], %65 {strides = array<i32>} : memref<288x512xbf16, #tpu.memory_space<vmem>>, vector<32x512xbf16>,
    %c480_i32 = arith.constant 480 : i32
    %67 = tpu.dynamic_rotate %28 by %c480_i32 dim 1 : vector<32x512xf32>, i32 -> vector<32x512xf32>
    %c7 = arith.constant 7 : index
    %c0_28 = arith.constant 0 : index
    %68 = vector.load %arg10[%c7, %c0_28] : memref<9x512xf32, #tpu.memory_space<vmem>>, vector<1x512xf32>
    %69 = vector.broadcast %68 : vector<1x512xf32> to vector<32x512xf32>
    %70 = arith.mulf %67, %69 : vector<32x512xf32>
    %71 = arith.truncf %70 : vector<32x512xf32> to vector<32x512xbf16>
    %c224 = arith.constant 224 : index
    %c0_29 = arith.constant 0 : index
    %72 = vector.load %arg12[%c224, %c0_29] : memref<288x512xbf16, #tpu.memory_space<vmem>>, vector<32x512xbf16>
    tpu.vector_store %arg12[%c224, %c0_29], %71 {strides = array<i32>} : memref<288x512xbf16, #tpu.memory_space<vmem>>, vector<32x512xbf16>,
    %c478_i32 = arith.constant 478 : i32
    %73 = tpu.dynamic_rotate %28 by %c478_i32 dim 1 : vector<32x512xf32>, i32 -> vector<32x512xf32>
    %c8 = arith.constant 8 : index
    %c0_30 = arith.constant 0 : index
    %74 = vector.load %arg10[%c8, %c0_30] : memref<9x512xf32, #tpu.memory_space<vmem>>, vector<1x512xf32>
    %75 = vector.broadcast %74 : vector<1x512xf32> to vector<32x512xf32>
    %76 = arith.mulf %73, %75 : vector<32x512xf32>
    %77 = arith.truncf %76 : vector<32x512xf32> to vector<32x512xbf16>
    %c256 = arith.constant 256 : index
    %c0_31 = arith.constant 0 : index
    %78 = vector.load %arg12[%c256, %c0_31] : memref<288x512xbf16, #tpu.memory_space<vmem>>, vector<32x512xbf16>
    tpu.vector_store %arg12[%c256, %c0_31], %77 {strides = array<i32>} : memref<288x512xbf16, #tpu.memory_space<vmem>>, vector<32x512xbf16>,
    %c0_32 = arith.constant 0 : index
    %c0_33 = arith.constant 0 : index
    %79 = vector.load %arg4[%c0_32, %c0_33] : memref<32x288xbf16, #tpu.memory_space<vmem>>, vector<32x288xbf16>
    %c0_34 = arith.constant 0 : index
    %c0_35 = arith.constant 0 : index
    %80 = vector.load %arg12[%c0_34, %c0_35] : memref<288x512xbf16, #tpu.memory_space<vmem>>, vector<288x512xbf16>
    %cst_36 = arith.constant dense<0.000000e+00> : vector<32x512xf32>
    %81 = tpu.matmul %79, %80, %cst_36 {dimension_numbers = #tpu.dot_dimension_numbers<[1], [0], [0], [1], [0, 0, 1, 1], [], []>} : vector<32x288xbf16>, vector<288x512xbf16>, vector<32x512xf32> -> vector<32x512xf32>
    %c0_37 = arith.constant 0 : index
    %c0_38 = arith.constant 0 : index
    %82 = vector.load %arg5[%c0_37, %c0_38] : memref<32x1xf32, #tpu.memory_space<vmem>>, vector<32x1xf32>
    %c0_39 = arith.constant 0 : index
    %c0_40 = arith.constant 0 : index
    %83 = vector.load %arg6[%c0_39, %c0_40] : memref<32x1xf32, #tpu.memory_space<vmem>>, vector<32x1xf32>
    %cst_41 = arith.constant dense<0.000000e+00> : vector<32xf32>
    %84 = vector.multi_reduction <add>, %81, %cst_41 [1] : vector<32x512xf32> to vector<32xf32>
    %85 = vector.shape_cast %84 : vector<32xf32> to vector<32x1xf32>
    %cst_42 = arith.constant 5.120000e+02 : f32
    %86 = vector.broadcast %cst_42 : f32 to vector<32x1xf32>
    %87 = arith.divf %85, %86 : vector<32x1xf32>
    %88 = arith.mulf %81, %81 : vector<32x512xf32>
    %cst_43 = arith.constant dense<0.000000e+00> : vector<32xf32>
    %89 = vector.multi_reduction <add>, %88, %cst_43 [1] : vector<32x512xf32> to vector<32xf32>
    %90 = vector.shape_cast %89 : vector<32xf32> to vector<32x1xf32>
    %cst_44 = arith.constant 5.120000e+02 : f32
    %91 = vector.broadcast %cst_44 : f32 to vector<32x1xf32>
    %92 = arith.divf %90, %91 : vector<32x1xf32>
    %93 = arith.mulf %87, %87 : vector<32x1xf32>
    %94 = arith.subf %92, %93 : vector<32x1xf32>
    %cst_45 = arith.constant 9.99999974E-6 : f32
    %95 = vector.broadcast %cst_45 : f32 to vector<32x1xf32>
    %96 = arith.addf %94, %95 : vector<32x1xf32>
    %97 = math.rsqrt %96 : vector<32x1xf32>
    %98 = arith.mulf %82, %97 : vector<32x1xf32>
    %99 = arith.mulf %87, %98 : vector<32x1xf32>
    %100 = arith.subf %83, %99 : vector<32x1xf32>
    %101 = vector.broadcast %98 : vector<32x1xf32> to vector<32x512xf32>
    %102 = arith.mulf %81, %101 : vector<32x512xf32>
    %103 = vector.broadcast %100 : vector<32x1xf32> to vector<32x512xf32>
    %104 = arith.addf %102, %103 : vector<32x512xf32>
    %cst_46 = arith.constant 0.000000e+00 : f32
    %105 = vector.broadcast %cst_46 : f32 to vector<32x512xf32>
    %106 = arith.maximumf %104, %105 : vector<32x512xf32>
    %c0_47 = arith.constant 0 : index
    %c0_48 = arith.constant 0 : index
    %107 = vector.load %arg7[%c0_47, %c0_48] : memref<64x32xbf16, #tpu.memory_space<vmem>>, vector<64x32xbf16>
    %108 = arith.truncf %106 : vector<32x512xf32> to vector<32x512xbf16>
    %cst_49 = arith.constant dense<0.000000e+00> : vector<64x512xf32>
    %109 = tpu.matmul %107, %108, %cst_49 {dimension_numbers = #tpu.dot_dimension_numbers<[1], [0], [0], [1], [0, 0, 1, 1], [], []>} : vector<64x32xbf16>, vector<32x512xbf16>, vector<64x512xf32> -> vector<64x512xf32>
    %c0_50 = arith.constant 0 : index
    %c0_51 = arith.constant 0 : index
    %110 = vector.load %arg8[%c0_50, %c0_51] : memref<64x1xf32, #tpu.memory_space<vmem>>, vector<64x1xf32>
    %c0_52 = arith.constant 0 : index
    %c0_53 = arith.constant 0 : index
    %111 = vector.load %arg9[%c0_52, %c0_53] : memref<64x1xf32, #tpu.memory_space<vmem>>, vector<64x1xf32>
    %cst_54 = arith.constant dense<0.000000e+00> : vector<64xf32>
    %112 = vector.multi_reduction <add>, %109, %cst_54 [1] : vector<64x512xf32> to vector<64xf32>
    %113 = vector.shape_cast %112 : vector<64xf32> to vector<64x1xf32>
    %cst_55 = arith.constant 5.120000e+02 : f32
    %114 = vector.broadcast %cst_55 : f32 to vector<64x1xf32>
    %115 = arith.divf %113, %114 : vector<64x1xf32>
    %116 = arith.mulf %109, %109 : vector<64x512xf32>
    %cst_56 = arith.constant dense<0.000000e+00> : vector<64xf32>
    %117 = vector.multi_reduction <add>, %116, %cst_56 [1] : vector<64x512xf32> to vector<64xf32>
    %118 = vector.shape_cast %117 : vector<64xf32> to vector<64x1xf32>
    %cst_57 = arith.constant 5.120000e+02 : f32
    %119 = vector.broadcast %cst_57 : f32 to vector<64x1xf32>
    %120 = arith.divf %118, %119 : vector<64x1xf32>
    %121 = arith.mulf %115, %115 : vector<64x1xf32>
    %122 = arith.subf %120, %121 : vector<64x1xf32>
    %cst_58 = arith.constant 9.99999974E-6 : f32
    %123 = vector.broadcast %cst_58 : f32 to vector<64x1xf32>
    %124 = arith.addf %122, %123 : vector<64x1xf32>
    %125 = math.rsqrt %124 : vector<64x1xf32>
    %126 = arith.mulf %110, %125 : vector<64x1xf32>
    %127 = arith.mulf %115, %126 : vector<64x1xf32>
    %128 = arith.subf %111, %127 : vector<64x1xf32>
    %129 = vector.broadcast %126 : vector<64x1xf32> to vector<64x512xf32>
    %130 = arith.mulf %109, %129 : vector<64x512xf32>
    %131 = vector.broadcast %128 : vector<64x1xf32> to vector<64x512xf32>
    %132 = arith.addf %130, %131 : vector<64x512xf32>
    %c0_59 = arith.constant 0 : index
    %c0_60 = arith.constant 0 : index
    %133 = vector.load %arg0[%c0_59, %c0_60] : memref<64x512xf32, #tpu.memory_space<vmem>>, vector<64x512xf32>
    %134 = arith.addf %132, %133 : vector<64x512xf32>
    %cst_61 = arith.constant 0.000000e+00 : f32
    %135 = vector.broadcast %cst_61 : f32 to vector<64x512xf32>
    %136 = arith.maximumf %134, %135 : vector<64x512xf32>
    %c0_62 = arith.constant 0 : index
    %c0_63 = arith.constant 0 : index
    %137 = vector.load %arg11[%c0_62, %c0_63] : memref<64x512xf32, #tpu.memory_space<vmem>>, vector<64x512xf32>
    tpu.vector_store %arg11[%c0_62, %c0_63], %136 {strides = array<i32>} : memref<64x512xf32, #tpu.memory_space<vmem>>, vector<64x512xf32>,
    return
  }
}

</mosaic_0001>

<llo_original>
// kernel: tpu_custom_call.1
$region0: #{tpu_custom_call.1}
  #allocation0 [shape = 'u32[]', space=smem, size = 0x4, offset = 0x4, fixed_abs, tag = 'smem constant byte address 0x4 - core index']
  #allocation1 [shape = 'u32[72,128]{1,0:T(1,128)}', space=vmem, size = 0x9000, scoped, tag = 'internal scratch']
  #allocation2 [shape = 'bf16[288,512]{1,0:T(8,128)(2,1)}', space=vmem, size = 0x48000, scoped, tag = 'scratch operand']
  %s0 = inlined_call_operand.hbm [shape: f32[64,512], index: 0, kind: input, shape index: {}]
  %s1 = inlined_call_operand.vmem [shape: bf16[32,64], index: 1, kind: input, shape index: {}]
  %s2 = inlined_call_operand.vmem [shape: f32[32,1], index: 2, kind: input, shape index: {}]
  %s3 = inlined_call_operand.vmem [shape: f32[32,1], index: 3, kind: input, shape index: {}]
  %s4 = inlined_call_operand.vmem [shape: bf16[32,288], index: 4, kind: input, shape index: {}]
  %s5 = inlined_call_operand.vmem [shape: f32[32,1], index: 5, kind: input, shape index: {}]
  %s6 = inlined_call_operand.vmem [shape: f32[32,1], index: 6, kind: input, shape index: {}]
  %s7 = inlined_call_operand.vmem [shape: bf16[64,32], index: 7, kind: input, shape index: {}]
  %s8 = inlined_call_operand.vmem [shape: f32[64,1], index: 8, kind: input, shape index: {}]
  %s9 = inlined_call_operand.vmem [shape: f32[64,1], index: 9, kind: input, shape index: {}]
  %s10 = inlined_call_operand.vmem [shape: f32[9,512], index: 10, kind: input, shape index: {}]
  %s11 = inlined_call_operand.hbm [shape: f32[64,512], index: 11, kind: output, shape index: {}]
  %s12 = sld [smem:[#allocation0]]
  $region58: #{tpu_custom_call.1} parent=0
    _
  %s14 = ssub.s32 1, %s12
  %s15 = scalar_select 0, %s14, %s12
  $region1: #{tpu_custom_call.1} parent=0
    #allocation3 [shape = 'u8[131072]{0}', space=vmem, size = 0x20000, scoped, tag = 'input window, operand 0, single buffered']
    #allocation4 [shape = 's32[1]{0}', space=sflag, size = 0x4, scoped, tag = 'scoped memory for tpu_custom_call.1']
    #allocation5 [shape = 's32[1]{0}', space=sflag, size = 0x4, scoped, tag = 'scoped memory for tpu_custom_call.1']
    #allocation6 [shape = 'u8[131072]{0}', space=vmem, size = 0x20000, scoped, tag = 'output window, operand 0, single buffered']
    %16 = vsyncpa [#allocation4], 0
    %17 = vsyncpa [#allocation5], 0
    // Predicated region
    $region2: #{tpu_custom_call.1} parent=1 // pred_check
      _
    $region3: #{tpu_custom_call.1} parent=1 // pred_check_branch
      %19 = sbr.rel (0) target = $region5
    $region4: #{tpu_custom_call.1} parent=1 // pred_region
      %21 = vsyncadd [#allocation4], 0
      %s22 = sshll.u32 %s0, 4
      %s23 = int_to_ptr.hbm [resolvable:$true] %s22
      %s24 = sshll.u32 [#allocation3], 4
      %s25 = int_to_ptr.vmem [resolvable:$true] %s24
      %30 = dma.hbm_to_vmem [thread:$0]  %s23, 4096, %s25, [#allocation4], 512, 512, 32
    $region5: #{tpu_custom_call.1} parent=1 // pred_fallthru
      _
    // Predicated region
    $region6: #{tpu_custom_call.1} parent=1 // pred_check
      _
    $region7: #{tpu_custom_call.1} parent=1 // pred_check_branch
      %32 = sbr.rel (0) target = $region9
    $region8: #{tpu_custom_call.1} parent=1 // pred_region
      _
    $region9: #{tpu_custom_call.1} parent=1 // pred_fallthru
      _
    // Predicated region
    $region10: #{tpu_custom_call.1} parent=1 // pred_check
      _
    $region11: #{tpu_custom_call.1} parent=1 // pred_check_branch
      %34 = sbr.rel (0) target = $region13
    $region12: #{tpu_custom_call.1} parent=1 // pred_region
      _
    $region13: #{tpu_custom_call.1} parent=1 // pred_fallthru
      _
    // Predicated region
    $region14: #{tpu_custom_call.1} parent=1 // pred_check
      _
    $region15: #{tpu_custom_call.1} parent=1 // pred_check_branch
      %36 = sbr.rel (0) target = $region17
    $region16: #{tpu_custom_call.1} parent=1 // pred_region
      _
    $region17: #{tpu_custom_call.1} parent=1 // pred_fallthru
      _
    // Predicated region
    $region18: #{tpu_custom_call.1} parent=1 // pred_check
      _
    $region19: #{tpu_custom_call.1} parent=1 // pred_check_branch
      %38 = sbr.rel (0) target = $region21
    $region20: #{tpu_custom_call.1} parent=1 // pred_region
      _
    $region21: #{tpu_custom_call.1} parent=1 // pred_fallthru
      _
    // Predicated region
    $region22: #{tpu_custom_call.1} parent=1 // pred_check
      _
    $region23: #{tpu_custom_call.1} parent=1 // pred_check_branch
      %40 = sbr.rel (0) target = $region25
    $region24: #{tpu_custom_call.1} parent=1 // pred_region
      _
    $region25: #{tpu_custom_call.1} parent=1 // pred_fallthru
      _
    // Predicated region
    $region26: #{tpu_custom_call.1} parent=1 // pred_check
      _
    $region27: #{tpu_custom_call.1} parent=1 // pred_check_branch
      %42 = sbr.rel (0) target = $region29
    $region28: #{tpu_custom_call.1} parent=1 // pred_region
      _
    $region29: #{tpu_custom_call.1} parent=1 // pred_fallthru
      _
    // Predicated region
    $region30: #{tpu_custom_call.1} parent=1 // pred_check
      _
    $region31: #{tpu_custom_call.1} parent=1 // pred_check_branch
      %44 = sbr.rel (0) target = $region33
    $region32: #{tpu_custom_call.1} parent=1 // pred_region
      _
    $region33: #{tpu_custom_call.1} parent=1 // pred_fallthru
      _
    // Predicated region
    $region34: #{tpu_custom_call.1} parent=1 // pred_check
      _
    $region35: #{tpu_custom_call.1} parent=1 // pred_check_branch
      %46 = sbr.rel (0) target = $region37
    $region36: #{tpu_custom_call.1} parent=1 // pred_region
      _
    $region37: #{tpu_custom_call.1} parent=1 // pred_fallthru
      _
    // Predicated region
    $region38: #{tpu_custom_call.1} parent=1 // pred_check
      _
    $region39: #{tpu_custom_call.1} parent=1 // pred_check_branch
      %48 = sbr.rel (0) target = $region41
    $region40: #{tpu_custom_call.1} parent=1 // pred_region
      _
    $region41: #{tpu_custom_call.1} parent=1 // pred_fallthru
      _
    // Predicated region
    $region42: #{tpu_custom_call.1} parent=1 // pred_check
      _
    $region43: #{tpu_custom_call.1} parent=1 // pred_check_branch
      %50 = sbr.rel (0) target = $region45
    $region44: #{tpu_custom_call.1} parent=1 // pred_region
      _
    $region45: #{tpu_custom_call.1} parent=1 // pred_fallthru
      _
    // Predicated region
    $region46: #{tpu_custom_call.1} parent=1 // pred_check
      _
    $region47: #{tpu_custom_call.1} parent=1 // pred_check_branch
      %52 = sbr.rel (0) target = $region49
    $region48: #{tpu_custom_call.1} parent=1 // pred_region
      %54 = dma.done [#allocation4], 4096
    $region49: #{tpu_custom_call.1} parent=1 // pred_fallthru
      _
    %v56 = vld [vmem:[%s1] sm:$0xf]
    %v57 = vld [vmem:[%s1 + $0x4] sm:$0xf]
    %v58 = vld [vmem:[%s1 + $0x8] sm:$0xf]
    %v59 = vld [vmem:[%s1 + $0xc] sm:$0xf]
    %v60 = vld [vmem:[#allocation3] sm:$0xff]
    %v61 = vld [vmem:[#allocation3 + $0x8] sm:$0xff]
    %v62 = vld [vmem:[#allocation3 + $0x10] sm:$0xff]
    %v63 = vld [vmem:[#allocation3 + $0x18] sm:$0xff]
    %v64 = vld [vmem:[#allocation3 + $0x20] sm:$0xff]
    %v65 = vld [vmem:[#allocation3 + $0x28] sm:$0xff]
    %v66 = vld [vmem:[#allocation3 + $0x30] sm:$0xff]
    %v67 = vld [vmem:[#allocation3 + $0x38] sm:$0xff]
    %v68 = vld [vmem:[#allocation3 + $0x40] sm:$0xff]
    %v69 = vld [vmem:[#allocation3 + $0x48] sm:$0xff]
    %v70 = vld [vmem:[#allocation3 + $0x50] sm:$0xff]
    %v71 = vld [vmem:[#allocation3 + $0x58] sm:$0xff]
    %v72 = vld [vmem:[#allocation3 + $0x60] sm:$0xff]
    %v73 = vld [vmem:[#allocation3 + $0x68] sm:$0xff]
    %v74 = vld [vmem:[#allocation3 + $0x70] sm:$0xff]
    %v75 = vld [vmem:[#allocation3 + $0x78] sm:$0xff]
    %v76 = vld [vmem:[#allocation3 + $0x80] sm:$0xff]
    %v77 = vld [vmem:[#allocation3 + $0x88] sm:$0xff]
    %v78 = vld [vmem:[#allocation3 + $0x90] sm:$0xff]
    %v79 = vld [vmem:[#allocation3 + $0x98] sm:$0xff]
    %v80 = vld [vmem:[#allocation3 + $0xa0] sm:$0xff]
    %v81 = vld [vmem:[#allocation3 + $0xa8] sm:$0xff]
    %v82 = vld [vmem:[#allocation3 + $0xb0] sm:$0xff]
    %v83 = vld [vmem:[#allocation3 + $0xb8] sm:$0xff]
    %v84 = vld [vmem:[#allocation3 + $0xc0] sm:$0xff]
    %v85 = vld [vmem:[#allocation3 + $0xc8] sm:$0xff]
    %v86 = vld [vmem:[#allocation3 + $0xd0] sm:$0xff]
    %v87 = vld [vmem:[#allocation3 + $0xd8] sm:$0xff]
    %v88 = vld [vmem:[#allocation3 + $0xe0] sm:$0xff]
    %v89 = vld [vmem:[#allocation3 + $0xe8] sm:$0xff]
    %v90 = vld [vmem:[#allocation3 + $0xf0] sm:$0xff]
    %v91 = vld [vmem:[#allocation3 + $0xf8] sm:$0xff]
    %v92 = vpack.c.bf16 %v64, %v60
    %v93 = vpack.c.bf16 %v65, %v61
    %v94 = vpack.c.bf16 %v66, %v62
    %v95 = vpack.c.bf16 %v67, %v63
    %v96 = vpack.c.bf16 %v72, %v68
    %v97 = vpack.c.bf16 %v73, %v69
    %v98 = vpack.c.bf16 %v74, %v70
    %v99 = vpack.c.bf16 %v75, %v71
    %v100 = vpack.c.bf16 %v80, %v76
    %v101 = vpack.c.bf16 %v81, %v77
    %v102 = vpack.c.bf16 %v82, %v78
    %v103 = vpack.c.bf16 %v83, %v79
    %v104 = vpack.c.bf16 %v88, %v84
    %v105 = vpack.c.bf16 %v89, %v85
    %v106 = vpack.c.bf16 %v90, %v86
    %v107 = vpack.c.bf16 %v91, %v87
    %v112 = vunpack.c.l.b16 %v56
    %v113 = vunpack.c.l.b16 %v57
    %v114 = vunpack.c.l.b16 %v58
    %v115 = vunpack.c.l.b16 %v59
    %v116 = vpack.c.b16 %v113, %v112
    %v117 = vpack.c.b16 %v115, %v114
    %vm118 = vcmask 523264
    %v120 = vsel %vm118, %v116, 0
    %v123 = vsel %vm118, %v117, 0
    %125 = vmatpush.bf16.msra.mxu0 0
    %126 = vmatpush.bf16.msra.mxu0 0
    %127 = vmatpush.bf16.msra.mxu0 0
    %128 = vmatpush.bf16.msra.mxu0 0
    %129 = vmatpush.bf16.msra.mxu0 %v104
    %130 = vmatpush.bf16.msra.mxu0 %v100
    %131 = vmatpush.bf16.msra.mxu0 %v96
    %132 = vmatpush.bf16.msra.mxu0 %v92
    %133 = vmatmul.bf16.gmra.mxu0 %v120
    %v134 = vpop.f32.mrf.mxu0
    %v135 = vadd.f32 0.0, %v134
    %v136 = vpop.f32.mrf.mxu0
    %v137 = vadd.f32 0.0, %v136
    %138 = vmatmul.bf16.gmra.mxu0 %v123
    %v139 = vpop.f32.mrf.mxu0
    %v140 = vadd.f32 0.0, %v139
    %v141 = vpop.f32.mrf.mxu0
    %v142 = vadd.f32 0.0, %v141
    %143 = vdwg.mxu0
    %144 = vmatpush.bf16.msra.mxu0 0
    %145 = vmatpush.bf16.msra.mxu0 0
    %146 = vmatpush.bf16.msra.mxu0 0
    %147 = vmatpush.bf16.msra.mxu0 0
    %148 = vmatpush.bf16.msra.mxu0 %v105
    %149 = vmatpush.bf16.msra.mxu0 %v101
    %150 = vmatpush.bf16.msra.mxu0 %v97
    %151 = vmatpush.bf16.msra.mxu0 %v93
    %152 = vmatmul.bf16.gmra.mxu0 %v120
    %v153 = vpop.f32.mrf.mxu0
    %v154 = vadd.f32 0.0, %v153
    %v155 = vpop.f32.mrf.mxu0
    %v156 = vadd.f32 0.0, %v155
    %157 = vmatmul.bf16.gmra.mxu0 %v123
    %v158 = vpop.f32.mrf.mxu0
    %v159 = vadd.f32 0.0, %v158
    %v160 = vpop.f32.mrf.mxu0
    %v161 = vadd.f32 0.0, %v160
    %162 = vdwg.mxu0
    %163 = vmatpush.bf16.msra.mxu0 0
    %164 = vmatpush.bf16.msra.mxu0 0
    %165 = vmatpush.bf16.msra.mxu0 0
    %166 = vmatpush.bf16.msra.mxu0 0
    %167 = vmatpush.bf16.msra.mxu0 %v106
    %168 = vmatpush.bf16.msra.mxu0 %v102
    %169 = vmatpush.bf16.msra.mxu0 %v98
    %170 = vmatpush.bf16.msra.mxu0 %v94
    %171 = vmatmul.bf16.gmra.mxu0 %v120
    %v172 = vpop.f32.mrf.mxu0
    %v173 = vadd.f32 0.0, %v172
    %v174 = vpop.f32.mrf.mxu0
    %v175 = vadd.f32 0.0, %v174
    %176 = vmatmul.bf16.gmra.mxu0 %v123
    %v177 = vpop.f32.mrf.mxu0
    %v178 = vadd.f32 0.0, %v177
    %v179 = vpop.f32.mrf.mxu0
    %v180 = vadd.f32 0.0, %v179
    %181 = vdwg.mxu0
    %182 = vmatpush.bf16.msra.mxu0 0
    %183 = vmatpush.bf16.msra.mxu0 0
    %184 = vmatpush.bf16.msra.mxu0 0
    %185 = vmatpush.bf16.msra.mxu0 0
    %186 = vmatpush.bf16.msra.mxu0 %v107
    %187 = vmatpush.bf16.msra.mxu0 %v103
    %188 = vmatpush.bf16.msra.mxu0 %v99
    %189 = vmatpush.bf16.msra.mxu0 %v95
    %190 = vmatmul.bf16.gmra.mxu0 %v120
    %v191 = vpop.f32.mrf.mxu0
    %v192 = vadd.f32 0.0, %v191
    %v193 = vpop.f32.mrf.mxu0
    %v194 = vadd.f32 0.0, %v193
    %195 = vmatmul.bf16.gmra.mxu0 %v123
    %v196 = vpop.f32.mrf.mxu0
    %v197 = vadd.f32 0.0, %v196
    %v198 = vpop.f32.mrf.mxu0
    %v199 = vadd.f32 0.0, %v198
    %200 = vdwg.mxu0
    %v201 = vld [vmem:[%s2] sm:$0xff]
    %v202 = vld [vmem:[%s2 + $0x8] sm:$0xff]
    %v203 = vld [vmem:[%s2 + $0x10] sm:$0xff]
    %v204 = vld [vmem:[%s2 + $0x18] sm:$0xff]
    %v205 = vld [vmem:[%s3] sm:$0xff]
    %v206 = vld [vmem:[%s3 + $0x8] sm:$0xff]
    %v207 = vld [vmem:[%s3 + $0x10] sm:$0xff]
    %v208 = vld [vmem:[%s3 + $0x18] sm:$0xff]
    %v209 = vadd.f32 %v135, %v154
    %v210 = vadd.f32 %v209, %v173
    %v211 = vadd.f32 %v210, %v192
    %212 = vadd.xlane.f32.xlu0 %v211
    %v213 = vpop.xlane.xlu0 %212
    %v214 = vadd.f32 %v137, %v156
    %v215 = vadd.f32 %v214, %v175
    %v216 = vadd.f32 %v215, %v194
    %217 = vadd.xlane.f32.xlu0 %v216
    %v218 = vpop.xlane.xlu0 %217
    %v219 = vadd.f32 %v140, %v159
    %v220 = vadd.f32 %v219, %v178
    %v221 = vadd.f32 %v220, %v197
    %222 = vadd.xlane.f32.xlu0 %v221
    %v223 = vpop.xlane.xlu0 %222
    %v224 = vadd.f32 %v142, %v161
    %v225 = vadd.f32 %v224, %v180
    %v226 = vadd.f32 %v225, %v199
    %227 = vadd.xlane.f32.xlu0 %v226
    %v228 = vpop.xlane.xlu0 %227
    %v229 = vrcp.pop 512.0
    %v230 = vmul.f32 512.0, %v229
    %v231 = vsub.f32 1.0, %v230
    %v232 = vmul.f32 %v229, %v231
    %v233 = vadd.f32 %v229, %v232
    %vm234 = vweird.f32 %v229
    %v235 = vsel %vm234, %v229, %v233
    %v236 = vmul.f32 %v213, %v235
    %v237 = vmul.f32 %v218, %v235
    %v238 = vmul.f32 %v223, %v235
    %v239 = vmul.f32 %v228, %v235
    %v240 = vmul.f32 %v135, %v135
    %v241 = vmul.f32 %v154, %v154
    %v242 = vmul.f32 %v173, %v173
    %v243 = vmul.f32 %v192, %v192
    %v244 = vmul.f32 %v137, %v137
    %v245 = vmul.f32 %v156, %v156
    %v246 = vmul.f32 %v175, %v175
    %v247 = vmul.f32 %v194, %v194
    %v248 = vmul.f32 %v140, %v140
    %v249 = vmul.f32 %v159, %v159
    %v250 = vmul.f32 %v178, %v178
    %v251 = vmul.f32 %v197, %v197
    %v252 = vmul.f32 %v142, %v142
    %v253 = vmul.f32 %v161, %v161
    %v254 = vmul.f32 %v180, %v180
    %v255 = vmul.f32 %v199, %v199
    %v256 = vadd.f32 %v240, %v241
    %v257 = vadd.f32 %v256, %v242
    %v258 = vadd.f32 %v257, %v243
    %259 = vadd.xlane.f32.xlu0 %v258
    %v260 = vpop.xlane.xlu0 %259
    %v261 = vadd.f32 %v244, %v245
    %v262 = vadd.f32 %v261, %v246
    %v263 = vadd.f32 %v262, %v247
    %264 = vadd.xlane.f32.xlu0 %v263
    %v265 = vpop.xlane.xlu0 %264
    %v266 = vadd.f32 %v248, %v249
    %v267 = vadd.f32 %v266, %v250
    %v268 = vadd.f32 %v267, %v251
    %269 = vadd.xlane.f32.xlu0 %v268
    %v270 = vpop.xlane.xlu0 %269
    %v271 = vadd.f32 %v252, %v253
    %v272 = vadd.f32 %v271, %v254
    %v273 = vadd.f32 %v272, %v255
    %274 = vadd.xlane.f32.xlu0 %v273
    %v275 = vpop.xlane.xlu0 %274
    %v276 = vmul.f32 %v260, %v235
    %v277 = vmul.f32 %v265, %v235
    %v278 = vmul.f32 %v270, %v235
    %v279 = vmul.f32 %v275, %v235
    %v280 = vmul.f32 %v236, %v236
    %v281 = vmul.f32 %v237, %v237
    %v282 = vmul.f32 %v238, %v238
    %v283 = vmul.f32 %v239, %v239
    %v284 = vsub.f32 %v276, %v280
    %v285 = vsub.f32 %v277, %v281
    %v286 = vsub.f32 %v278, %v282
    %v287 = vsub.f32 %v279, %v283
    %v288 = vadd.f32 %v284, 1e-05
    %v289 = vadd.f32 %v285, 1e-05
    %v290 = vadd.f32 %v286, 1e-05
    %v291 = vadd.f32 %v287, 1e-05
    %v292 = vrsqrt.pop %v288
    %v293 = vmul.f32 %v292, %v288
    %v294 = vmul.f32 %v293, %v292
    %v295 = vmul.f32 0.5, %v294
    %v296 = vsub.f32 1.5, %v295
    %v297 = vmul.f32 %v292, %v296
    %vm298 = vweird.f32 %v288
    %vm299 = vweird.f32 %v292
    %vm300 = vmor %vm298, %vm299
    %v301 = vsel %vm300, %v292, %v297
    %v302 = vrsqrt.pop %v289
    %v303 = vmul.f32 %v302, %v289
    %v304 = vmul.f32 %v303, %v302
    %v305 = vmul.f32 0.5, %v304
    %v306 = vsub.f32 1.5, %v305
    %v307 = vmul.f32 %v302, %v306
    %vm308 = vweird.f32 %v289
    %vm309 = vweird.f32 %v302
    %vm310 = vmor %vm308, %vm309
    %v311 = vsel %vm310, %v302, %v307
    %v312 = vrsqrt.pop %v290
    %v313 = vmul.f32 %v312, %v290
    %v314 = vmul.f32 %v313, %v312
    %v315 = vmul.f32 0.5, %v314
    %v316 = vsub.f32 1.5, %v315
    %v317 = vmul.f32 %v312, %v316
    %vm318 = vweird.f32 %v290
    %vm319 = vweird.f32 %v312
    %vm320 = vmor %vm318, %vm319
    %v321 = vsel %vm320, %v312, %v317
    %v322 = vrsqrt.pop %v291
    %v323 = vmul.f32 %v322, %v291
    %v324 = vmul.f32 %v323, %v322
    %v325 = vmul.f32 0.5, %v324
    %v326 = vsub.f32 1.5, %v325
    %v327 = vmul.f32 %v322, %v326
    %vm328 = vweird.f32 %v291
    %vm329 = vweird.f32 %v322
    %vm330 = vmor %vm328, %vm329
    %v331 = vsel %vm330, %v322, %v327
    %v332 = vmul.f32 %v201, %v301
    %v333 = vmul.f32 %v202, %v311
    %v334 = vmul.f32 %v203, %v321
    %v335 = vmul.f32 %v204, %v331
    %v336 = vmul.f32 %v236, %v332
    %v337 = vmul.f32 %v237, %v333
    %v338 = vmul.f32 %v238, %v334
    %v339 = vmul.f32 %v239, %v335
    %v340 = vsub.f32 %v205, %v336
    %v341 = vsub.f32 %v206, %v337
    %v342 = vsub.f32 %v207, %v338
    %v343 = vsub.f32 %v208, %v339
    %345 = vset.pattern.permute.xlu0 0
    %346 = vperm.xlu0 %345, %v332
    %v347 = vpop.permute.xlu0 %346
    %350 = vset.pattern.permute.xlu0 0
    %351 = vperm.xlu0 %350, %v333
    %v352 = vpop.permute.xlu0 %351
    %355 = vset.pattern.permute.xlu0 0
    %356 = vperm.xlu0 %355, %v334
    %v357 = vpop.permute.xlu0 %356
    %360 = vset.pattern.permute.xlu0 0
    %361 = vperm.xlu0 %360, %v335
    %v362 = vpop.permute.xlu0 %361
    %v364 = vmul.f32 %v135, %v347
    %v365 = vmul.f32 %v154, %v347
    %v366 = vmul.f32 %v173, %v347
    %v367 = vmul.f32 %v192, %v347
    %v368 = vmul.f32 %v137, %v352
    %v369 = vmul.f32 %v156, %v352
    %v370 = vmul.f32 %v175, %v352
    %v371 = vmul.f32 %v194, %v352
    %v372 = vmul.f32 %v140, %v357
    %v373 = vmul.f32 %v159, %v357
    %v374 = vmul.f32 %v178, %v357
    %v375 = vmul.f32 %v197, %v357
    %v376 = vmul.f32 %v142, %v362
    %v377 = vmul.f32 %v161, %v362
    %v378 = vmul.f32 %v180, %v362
    %v379 = vmul.f32 %v199, %v362
    %381 = vset.pattern.permute.xlu0 0
    %382 = vperm.xlu0 %381, %v340
    %v383 = vpop.permute.xlu0 %382
    %386 = vset.pattern.permute.xlu0 0
    %387 = vperm.xlu0 %386, %v341
    %v388 = vpop.permute.xlu0 %387
    %391 = vset.pattern.permute.xlu0 0
    %392 = vperm.xlu0 %391, %v342
    %v393 = vpop.permute.xlu0 %392
    %396 = vset.pattern.permute.xlu0 0
    %397 = vperm.xlu0 %396, %v343
    %v398 = vpop.permute.xlu0 %397
    %v400 = vadd.f32 %v364, %v383
    %v401 = vadd.f32 %v365, %v383
    %v402 = vadd.f32 %v366, %v383
    %v403 = vadd.f32 %v367, %v383
    %v404 = vadd.f32 %v368, %v388
    %v405 = vadd.f32 %v369, %v388
    %v406 = vadd.f32 %v370, %v388
    %v407 = vadd.f32 %v371, %v388
    %v408 = vadd.f32 %v372, %v393
    %v409 = vadd.f32 %v373, %v393
    %v410 = vadd.f32 %v374, %v393
    %v411 = vadd.f32 %v375, %v393
    %v412 = vadd.f32 %v376, %v398
    %v413 = vadd.f32 %v377, %v398
    %v414 = vadd.f32 %v378, %v398
    %v415 = vadd.f32 %v379, %v398
    %v416 = vmax.f32 %v400, 0.0
    %v417 = vmax.f32 %v401, 0.0
    %v418 = vmax.f32 %v402, 0.0
    %v419 = vmax.f32 %v403, 0.0
    %v420 = vmax.f32 %v404, 0.0
    %v421 = vmax.f32 %v405, 0.0
    %v422 = vmax.f32 %v406, 0.0
    %v423 = vmax.f32 %v407, 0.0
    %v424 = vmax.f32 %v408, 0.0
    %v425 = vmax.f32 %v409, 0.0
    %v426 = vmax.f32 %v410, 0.0
    %v427 = vmax.f32 %v411, 0.0
    %v428 = vmax.f32 %v412, 0.0
    %v429 = vmax.f32 %v413, 0.0
    %v430 = vmax.f32 %v414, 0.0
    %v431 = vmax.f32 %v415, 0.0
    %432 = vrot.lane.b32.xlu0 %v416, 34
    %v433 = vpop.permute.xlu0 %432
    %434 = vrot.lane.b32.xlu0 %v420, 34
    %v435 = vpop.permute.xlu0 %434
    %436 = vrot.lane.b32.xlu0 %v424, 34
    %v437 = vpop.permute.xlu0 %436
    %438 = vrot.lane.b32.xlu0 %v428, 34
    %v439 = vpop.permute.xlu0 %438
    %440 = vrot.lane.b32.xlu0 %v417, 34
    %v441 = vpop.permute.xlu0 %440
    %442 = vrot.lane.b32.xlu0 %v421, 34
    %v443 = vpop.permute.xlu0 %442
    %444 = vrot.lane.b32.xlu0 %v425, 34
    %v445 = vpop.permute.xlu0 %444
    %446 = vrot.lane.b32.xlu0 %v429, 34
    %v447 = vpop.permute.xlu0 %446
    %448 = vrot.lane.b32.xlu0 %v418, 34
    %v449 = vpop.permute.xlu0 %448
    %450 = vrot.lane.b32.xlu0 %v422, 34
    %v451 = vpop.permute.xlu0 %450
    %452 = vrot.lane.b32.xlu0 %v426, 34
    %v453 = vpop.permute.xlu0 %452
    %454 = vrot.lane.b32.xlu0 %v430, 34
    %v455 = vpop.permute.xlu0 %454
    %456 = vrot.lane.b32.xlu0 %v419, 34
    %v457 = vpop.permute.xlu0 %456
    %458 = vrot.lane.b32.xlu0 %v423, 34
    %v459 = vpop.permute.xlu0 %458
    %460 = vrot.lane.b32.xlu0 %v427, 34
    %v461 = vpop.permute.xlu0 %460
    %462 = vrot.lane.b32.xlu0 %v431, 34
    %v463 = vpop.permute.xlu0 %462
    %v464 = vlaneseq
    %v465 = vand.u32 %v464, 127
    %vm466 = vcmp.lt.s32.totalorder %v465, 34
    %v467 = vsel %vm466, %v449, %v457
    %v468 = vsel %vm466, %v451, %v459
    %v469 = vsel %vm466, %v453, %v461
    %v470 = vsel %vm466, %v455, %v463
    %v471 = vsel %vm466, %v441, %v449
    %v472 = vsel %vm466, %v443, %v451
    %v473 = vsel %vm466, %v445, %v453
    %v474 = vsel %vm466, %v447, %v455
    %v475 = vsel %vm466, %v433, %v441
    %v476 = vsel %vm466, %v435, %v443
    %v477 = vsel %vm466, %v437, %v445
    %v478 = vsel %vm466, %v439, %v447
    %v479 = vsel %vm466, %v457, %v433
    %v480 = vsel %vm466, %v459, %v435
    %v481 = vsel %vm466, %v461, %v437
    %v482 = vsel %vm466, %v463, %v439
    %v483 = vld [vmem:[%s10] ss:$8 sm:$0xf]
    %v485 = vperm.slane %v483, 0
    %v486 = vperm.slane %v483, 1
    %v487 = vperm.slane %v483, 2
    %v488 = vperm.slane %v483, 3
    %v493 = vmul.f32 %v479, %v485
    %v494 = vmul.f32 %v475, %v486
    %v495 = vmul.f32 %v471, %v487
    %v496 = vmul.f32 %v467, %v488
    %v497 = vmul.f32 %v480, %v485
    %v498 = vmul.f32 %v476, %v486
    %v499 = vmul.f32 %v472, %v487
    %v500 = vmul.f32 %v468, %v488
    %v501 = vmul.f32 %v481, %v485
    %v502 = vmul.f32 %v477, %v486
    %v503 = vmul.f32 %v473, %v487
    %v504 = vmul.f32 %v469, %v488
    %v505 = vmul.f32 %v482, %v485
    %v506 = vmul.f32 %v478, %v486
    %v507 = vmul.f32 %v474, %v487
    %v508 = vmul.f32 %v470, %v488
    %v509 = vpack.c.bf16 %v494, %v493
    %v510 = vpack.c.bf16 %v496, %v495
    %v511 = vpack.c.bf16 %v498, %v497
    %v512 = vpack.c.bf16 %v500, %v499
    %v513 = vpack.c.bf16 %v502, %v501
    %v514 = vpack.c.bf16 %v504, %v503
    %v515 = vpack.c.bf16 %v506, %v505
    %v516 = vpack.c.bf16 %v508, %v507
    %517 = vst [vmem:[#allocation2] sm:$0xff] %v509
    %518 = vst [vmem:[#allocation2 + $0x8] sm:$0xff] %v510
    %519 = vst [vmem:[#allocation2 + $0x10] sm:$0xff] %v511
    %520 = vst [vmem:[#allocation2 + $0x18] sm:$0xff] %v512
    %521 = vst [vmem:[#allocation2 + $0x20] sm:$0xff] %v513
    %522 = vst [vmem:[#allocation2 + $0x28] sm:$0xff] %v514
    %523 = vst [vmem:[#allocation2 + $0x30] sm:$0xff] %v515
    %524 = vst [vmem:[#allocation2 + $0x38] sm:$0xff] %v516
    %525 = vrot.lane.b32.xlu0 %v416, 32
    %v526 = vpop.permute.xlu0 %525
    %527 = vrot.lane.b32.xlu0 %v420, 32
    %v528 = vpop.permute.xlu0 %527
    %529 = vrot.lane.b32.xlu0 %v424, 32
    %v530 = vpop.permute.xlu0 %529
    %531 = vrot.lane.b32.xlu0 %v428, 32
    %v532 = vpop.permute.xlu0 %531
    %533 = vrot.lane.b32.xlu0 %v417, 32
    %v534 = vpop.permute.xlu0 %533
    %535 = vrot.lane.b32.xlu0 %v421, 32
    %v536 = vpop.permute.xlu0 %535
    %537 = vrot.lane.b32.xlu0 %v425, 32
    %v538 = vpop.permute.xlu0 %537
    %539 = vrot.lane.b32.xlu0 %v429, 32
    %v540 = vpop.permute.xlu0 %539
    %541 = vrot.lane.b32.xlu0 %v418, 32
    %v542 = vpop.permute.xlu0 %541
    %543 = vrot.lane.b32.xlu0 %v422, 32
    %v544 = vpop.permute.xlu0 %543
    %545 = vrot.lane.b32.xlu0 %v426, 32
    %v546 = vpop.permute.xlu0 %545
    %547 = vrot.lane.b32.xlu0 %v430, 32
    %v548 = vpop.permute.xlu0 %547
    %549 = vrot.lane.b32.xlu0 %v419, 32
    %v550 = vpop.permute.xlu0 %549
    %551 = vrot.lane.b32.xlu0 %v423, 32
    %v552 = vpop.permute.xlu0 %551
    %553 = vrot.lane.b32.xlu0 %v427, 32
    %v554 = vpop.permute.xlu0 %553
    %555 = vrot.lane.b32.xlu0 %v431, 32
    %v556 = vpop.permute.xlu0 %555
    %vm557 = vcmp.lt.s32.totalorder %v465, 32
    %v558 = vsel %vm557, %v542, %v550
    %v559 = vsel %vm557, %v544, %v552
    %v560 = vsel %vm557, %v546, %v554
    %v561 = vsel %vm557, %v548, %v556
    %v562 = vsel %vm557, %v534, %v542
    %v563 = vsel %vm557, %v536, %v544
    %v564 = vsel %vm557, %v538, %v546
    %v565 = vsel %vm557, %v540, %v548
    %v566 = vsel %vm557, %v526, %v534
    %v567 = vsel %vm557, %v528, %v536
    %v568 = vsel %vm557, %v530, %v538
    %v569 = vsel %vm557, %v532, %v540
    %v570 = vsel %vm557, %v550, %v526
    %v571 = vsel %vm557, %v552, %v528
    %v572 = vsel %vm557, %v554, %v530
    %v573 = vsel %vm557, %v556, %v532
    %s574 = scalar_lea.vmem %s10, 1
    %v575 = vld [vmem:[%s574] ss:$8 sm:$0xf]
    %v577 = vperm.slane %v575, 0
    %v578 = vperm.slane %v575, 1
    %v579 = vperm.slane %v575, 2
    %v580 = vperm.slane %v575, 3
    %v585 = vmul.f32 %v570, %v577
    %v586 = vmul.f32 %v566, %v578
    %v587 = vmul.f32 %v562, %v579
    %v588 = vmul.f32 %v558, %v580
    %v589 = vmul.f32 %v571, %v577
    %v590 = vmul.f32 %v567, %v578
    %v591 = vmul.f32 %v563, %v579
    %v592 = vmul.f32 %v559, %v580
    %v593 = vmul.f32 %v572, %v577
    %v594 = vmul.f32 %v568, %v578
    %v595 = vmul.f32 %v564, %v579
    %v596 = vmul.f32 %v560, %v580
    %v597 = vmul.f32 %v573, %v577
    %v598 = vmul.f32 %v569, %v578
    %v599 = vmul.f32 %v565, %v579
    %v600 = vmul.f32 %v561, %v580
    %v601 = vpack.c.bf16 %v586, %v585
    %v602 = vpack.c.bf16 %v588, %v587
    %v603 = vpack.c.bf16 %v590, %v589
    %v604 = vpack.c.bf16 %v592, %v591
    %v605 = vpack.c.bf16 %v594, %v593
    %v606 = vpack.c.bf16 %v596, %v595
    %v607 = vpack.c.bf16 %v598, %v597
    %v608 = vpack.c.bf16 %v600, %v599
    %609 = vst [vmem:[#allocation2 + $0x40] sm:$0xff] %v601
    %610 = vst [vmem:[#allocation2 + $0x48] sm:$0xff] %v602
    %611 = vst [vmem:[#allocation2 + $0x50] sm:$0xff] %v603
    %612 = vst [vmem:[#allocation2 + $0x58] sm:$0xff] %v604
    %613 = vst [vmem:[#allocation2 + $0x60] sm:$0xff] %v605
    %614 = vst [vmem:[#allocation2 + $0x68] sm:$0xff] %v606
    %615 = vst [vmem:[#allocation2 + $0x70] sm:$0xff] %v607
    %616 = vst [vmem:[#allocation2 + $0x78] sm:$0xff] %v608
    %617 = vrot.lane.b32.xlu0 %v416, 30
    %v618 = vpop.permute.xlu0 %617
    %619 = vrot.lane.b32.xlu0 %v420, 30
    %v620 = vpop.permute.xlu0 %619
    %621 = vrot.lane.b32.xlu0 %v424, 30
    %v622 = vpop.permute.xlu0 %621
    %623 = vrot.lane.b32.xlu0 %v428, 30
    %v624 = vpop.permute.xlu0 %623
    %625 = vrot.lane.b32.xlu0 %v417, 30
    %v626 = vpop.permute.xlu0 %625
    %627 = vrot.lane.b32.xlu0 %v421, 30
    %v628 = vpop.permute.xlu0 %627
    %629 = vrot.lane.b32.xlu0 %v425, 30
    %v630 = vpop.permute.xlu0 %629
    %631 = vrot.lane.b32.xlu0 %v429, 30
    %v632 = vpop.permute.xlu0 %631
    %633 = vrot.lane.b32.xlu0 %v418, 30
    %v634 = vpop.permute.xlu0 %633
    %635 = vrot.lane.b32.xlu0 %v422, 30
    %v636 = vpop.permute.xlu0 %635
    %637 = vrot.lane.b32.xlu0 %v426, 30
    %v638 = vpop.permute.xlu0 %637
    %639 = vrot.lane.b32.xlu0 %v430, 30
    %v640 = vpop.permute.xlu0 %639
    %641 = vrot.lane.b32.xlu0 %v419, 30
    %v642 = vpop.permute.xlu0 %641
    %643 = vrot.lane.b32.xlu0 %v423, 30
    %v644 = vpop.permute.xlu0 %643
    %645 = vrot.lane.b32.xlu0 %v427, 30
    %v646 = vpop.permute.xlu0 %645
    %647 = vrot.lane.b32.xlu0 %v431, 30
    %v648 = vpop.permute.xlu0 %647
    %vm649 = vcmp.lt.s32.totalorder %v465, 30
    %v650 = vsel %vm649, %v634, %v642
    %v651 = vsel %vm649, %v636, %v644
    %v652 = vsel %vm649, %v638, %v646
    %v653 = vsel %vm649, %v640, %v648
    %v654 = vsel %vm649, %v626, %v634
    %v655 = vsel %vm649, %v628, %v636
    %v656 = vsel %vm649, %v630, %v638
    %v657 = vsel %vm649, %v632, %v640
    %v658 = vsel %vm649, %v618, %v626
    %v659 = vsel %vm649, %v620, %v628
    %v660 = vsel %vm649, %v622, %v630
    %v661 = vsel %vm649, %v624, %v632
    %v662 = vsel %vm649, %v642, %v618
    %v663 = vsel %vm649, %v644, %v620
    %v664 = vsel %vm649, %v646, %v622
    %v665 = vsel %vm649, %v648, %v624
    %s666 = scalar_lea.vmem %s10, 2
    %v667 = vld [vmem:[%s666] ss:$8 sm:$0xf]
    %v669 = vperm.slane %v667, 0
    %v670 = vperm.slane %v667, 1
    %v671 = vperm.slane %v667, 2
    %v672 = vperm.slane %v667, 3
    %v677 = vmul.f32 %v662, %v669
    %v678 = vmul.f32 %v658, %v670
    %v679 = vmul.f32 %v654, %v671
    %v680 = vmul.f32 %v650, %v672
    %v681 = vmul.f32 %v663, %v669
    %v682 = vmul.f32 %v659, %v670
    %v683 = vmul.f32 %v655, %v671
    %v684 = vmul.f32 %v651, %v672
    %v685 = vmul.f32 %v664, %v669
    %v686 = vmul.f32 %v660, %v670
    %v687 = vmul.f32 %v656, %v671
    %v688 = vmul.f32 %v652, %v672
    %v689 = vmul.f32 %v665, %v669
    %v690 = vmul.f32 %v661, %v670
    %v691 = vmul.f32 %v657, %v671
    %v692 = vmul.f32 %v653, %v672
    %v693 = vpack.c.bf16 %v678, %v677
    %v694 = vpack.c.bf16 %v680, %v679
    %v695 = vpack.c.bf16 %v682, %v681
    %v696 = vpack.c.bf16 %v684, %v683
    %v697 = vpack.c.bf16 %v686, %v685
    %v698 = vpack.c.bf16 %v688, %v687
    %v699 = vpack.c.bf16 %v690, %v689
    %v700 = vpack.c.bf16 %v692, %v691
    %701 = vst [vmem:[#allocation2 + $0x80] sm:$0xff] %v693
    %702 = vst [vmem:[#allocation2 + $0x88] sm:$0xff] %v694
    %703 = vst [vmem:[#allocation2 + $0x90] sm:$0xff] %v695
    %704 = vst [vmem:[#allocation2 + $0x98] sm:$0xff] %v696
    %705 = vst [vmem:[#allocation2 + $0xa0] sm:$0xff] %v697
    %706 = vst [vmem:[#allocation2 + $0xa8] sm:$0xff] %v698
    %707 = vst [vmem:[#allocation2 + $0xb0] sm:$0xff] %v699
    %708 = vst [vmem:[#allocation2 + $0xb8] sm:$0xff] %v700
    %709 = vrot.lane.b32.xlu0 %v416, 2
    %v710 = vpop.permute.xlu0 %709
    %711 = vrot.lane.b32.xlu0 %v420, 2
    %v712 = vpop.permute.xlu0 %711
    %713 = vrot.lane.b32.xlu0 %v424, 2
    %v714 = vpop.permute.xlu0 %713
    %715 = vrot.lane.b32.xlu0 %v428, 2
    %v716 = vpop.permute.xlu0 %715
    %717 = vrot.lane.b32.xlu0 %v417, 2
    %v718 = vpop.permute.xlu0 %717
    %719 = vrot.lane.b32.xlu0 %v421, 2
    %v720 = vpop.permute.xlu0 %719
    %721 = vrot.lane.b32.xlu0 %v425, 2
    %v722 = vpop.permute.xlu0 %721
    %723 = vrot.lane.b32.xlu0 %v429, 2
    %v724 = vpop.permute.xlu0 %723
    %725 = vrot.lane.b32.xlu0 %v418, 2
    %v726 = vpop.permute.xlu0 %725
    %727 = vrot.lane.b32.xlu0 %v422, 2
    %v728 = vpop.permute.xlu0 %727
    %729 = vrot.lane.b32.xlu0 %v426, 2
    %v730 = vpop.permute.xlu0 %729
    %731 = vrot.lane.b32.xlu0 %v430, 2
    %v732 = vpop.permute.xlu0 %731
    %733 = vrot.lane.b32.xlu0 %v419, 2
    %v734 = vpop.permute.xlu0 %733
    %735 = vrot.lane.b32.xlu0 %v423, 2
    %v736 = vpop.permute.xlu0 %735
    %737 = vrot.lane.b32.xlu0 %v427, 2
    %v738 = vpop.permute.xlu0 %737
    %739 = vrot.lane.b32.xlu0 %v431, 2
    %v740 = vpop.permute.xlu0 %739
    %vm741 = vcmp.lt.s32.totalorder %v465, 2
    %v742 = vsel %vm741, %v726, %v734
    %v743 = vsel %vm741, %v728, %v736
    %v744 = vsel %vm741, %v730, %v738
    %v745 = vsel %vm741, %v732, %v740
    %v746 = vsel %vm741, %v718, %v726
    %v747 = vsel %vm741, %v720, %v728
    %v748 = vsel %vm741, %v722, %v730
    %v749 = vsel %vm741, %v724, %v732
    %v750 = vsel %vm741, %v710, %v718
    %v751 = vsel %vm741, %v712, %v720
    %v752 = vsel %vm741, %v714, %v722
    %v753 = vsel %vm741, %v716, %v724
    %v754 = vsel %vm741, %v734, %v710
    %v755 = vsel %vm741, %v736, %v712
    %v756 = vsel %vm741, %v738, %v714
    %v757 = vsel %vm741, %v740, %v716
    %s758 = scalar_lea.vmem %s10, 3
    %v759 = vld [vmem:[%s758] ss:$8 sm:$0xf]
    %v761 = vperm.slane %v759, 0
    %v762 = vperm.slane %v759, 1
    %v763 = vperm.slane %v759, 2
    %v764 = vperm.slane %v759, 3
    %v769 = vmul.f32 %v754, %v761
    %v770 = vmul.f32 %v750, %v762
    %v771 = vmul.f32 %v746, %v763
    %v772 = vmul.f32 %v742, %v764
    %v773 = vmul.f32 %v755, %v761
    %v774 = vmul.f32 %v751, %v762
    %v775 = vmul.f32 %v747, %v763
    %v776 = vmul.f32 %v743, %v764
    %v777 = vmul.f32 %v756, %v761
    %v778 = vmul.f32 %v752, %v762
    %v779 = vmul.f32 %v748, %v763
    %v780 = vmul.f32 %v744, %v764
    %v781 = vmul.f32 %v757, %v761
    %v782 = vmul.f32 %v753, %v762
    %v783 = vmul.f32 %v749, %v763
    %v784 = vmul.f32 %v745, %v764
    %v785 = vpack.c.bf16 %v770, %v769
    %v786 = vpack.c.bf16 %v772, %v771
    %v787 = vpack.c.bf16 %v774, %v773
    %v788 = vpack.c.bf16 %v776, %v775
    %v789 = vpack.c.bf16 %v778, %v777
    %v790 = vpack.c.bf16 %v780, %v779
    %v791 = vpack.c.bf16 %v782, %v781
    %v792 = vpack.c.bf16 %v784, %v783
    %793 = vst [vmem:[#allocation2 + $0xc0] sm:$0xff] %v785
    %794 = vst [vmem:[#allocation2 + $0xc8] sm:$0xff] %v786
    %795 = vst [vmem:[#allocation2 + $0xd0] sm:$0xff] %v787
    %796 = vst [vmem:[#allocation2 + $0xd8] sm:$0xff] %v788
    %797 = vst [vmem:[#allocation2 + $0xe0] sm:$0xff] %v789
    %798 = vst [vmem:[#allocation2 + $0xe8] sm:$0xff] %v790
    %799 = vst [vmem:[#allocation2 + $0xf0] sm:$0xff] %v791
    %800 = vst [vmem:[#allocation2 + $0xf8] sm:$0xff] %v792
    %v801 = vpack.c.bf16 %v417, %v416
    %v802 = vpack.c.bf16 %v419, %v418
    %v803 = vpack.c.bf16 %v421, %v420
    %v804 = vpack.c.bf16 %v423, %v422
    %v805 = vpack.c.bf16 %v425, %v424
    %v806 = vpack.c.bf16 %v427, %v426
    %v807 = vpack.c.bf16 %v429, %v428
    %v808 = vpack.c.bf16 %v431, %v430
    %809 = vst [vmem:[#allocation2 + $0x100] sm:$0xff] %v801
    %810 = vst [vmem:[#allocation2 + $0x108] sm:$0xff] %v802
    %811 = vst [vmem:[#allocation2 + $0x110] sm:$0xff] %v803
    %812 = vst [vmem:[#allocation2 + $0x118] sm:$0xff] %v804
    %813 = vst [vmem:[#allocation2 + $0x120] sm:$0xff] %v805
    %814 = vst [vmem:[#allocation2 + $0x128] sm:$0xff] %v806
    %815 = vst [vmem:[#allocation2 + $0x130] sm:$0xff] %v807
    %816 = vst [vmem:[#allocation2 + $0x138] sm:$0xff] %v808
    %817 = vrot.lane.b32.xlu0 %v416, 126
    %v818 = vpop.permute.xlu0 %817
    %819 = vrot.lane.b32.xlu0 %v420, 126
    %v820 = vpop.permute.xlu0 %819
    %821 = vrot.lane.b32.xlu0 %v424, 126
    %v822 = vpop.permute.xlu0 %821
    %823 = vrot.lane.b32.xlu0 %v428, 126
    %v824 = vpop.permute.xlu0 %823
    %825 = vrot.lane.b32.xlu0 %v417, 126
    %v826 = vpop.permute.xlu0 %825
    %827 = vrot.lane.b32.xlu0 %v421, 126
    %v828 = vpop.permute.xlu0 %827
    %829 = vrot.lane.b32.xlu0 %v425, 126
    %v830 = vpop.permute.xlu0 %829
    %831 = vrot.lane.b32.xlu0 %v429, 126
    %v832 = vpop.permute.xlu0 %831
    %833 = vrot.lane.b32.xlu0 %v418, 126
    %v834 = vpop.permute.xlu0 %833
    %835 = vrot.lane.b32.xlu0 %v422, 126
    %v836 = vpop.permute.xlu0 %835
    %837 = vrot.lane.b32.xlu0 %v426, 126
    %v838 = vpop.permute.xlu0 %837
    %839 = vrot.lane.b32.xlu0 %v430, 126
    %v840 = vpop.permute.xlu0 %839
    %841 = vrot.lane.b32.xlu0 %v419, 126
    %v842 = vpop.permute.xlu0 %841
    %843 = vrot.lane.b32.xlu0 %v423, 126
    %v844 = vpop.permute.xlu0 %843
    %845 = vrot.lane.b32.xlu0 %v427, 126
    %v846 = vpop.permute.xlu0 %845
    %847 = vrot.lane.b32.xlu0 %v431, 126
    %v848 = vpop.permute.xlu0 %847
    %vm849 = vcmp.lt.s32.totalorder %v465, 126
    %v850 = vsel %vm849, %v834, %v842
    %v851 = vsel %vm849, %v836, %v844
    %v852 = vsel %vm849, %v838, %v846
    %v853 = vsel %vm849, %v840, %v848
    %v854 = vsel %vm849, %v826, %v834
    %v855 = vsel %vm849, %v828, %v836
    %v856 = vsel %vm849, %v830, %v838
    %v857 = vsel %vm849, %v832, %v840
    %v858 = vsel %vm849, %v818, %v826
    %v859 = vsel %vm849, %v820, %v828
    %v860 = vsel %vm849, %v822, %v830
    %v861 = vsel %vm849, %v824, %v832
    %v862 = vsel %vm849, %v842, %v818
    %v863 = vsel %vm849, %v844, %v820
    %v864 = vsel %vm849, %v846, %v822
    %v865 = vsel %vm849, %v848, %v824
    %s866 = scalar_lea.vmem %s10, 5
    %v867 = vld [vmem:[%s866] ss:$8 sm:$0xf]
    %v869 = vperm.slane %v867, 0
    %v870 = vperm.slane %v867, 1
    %v871 = vperm.slane %v867, 2
    %v872 = vperm.slane %v867, 3
    %v877 = vmul.f32 %v858, %v869
    %v878 = vmul.f32 %v854, %v870
    %v879 = vmul.f32 %v850, %v871
    %v880 = vmul.f32 %v862, %v872
    %v881 = vmul.f32 %v859, %v869
    %v882 = vmul.f32 %v855, %v870
    %v883 = vmul.f32 %v851, %v871
    %v884 = vmul.f32 %v863, %v872
    %v885 = vmul.f32 %v860, %v869
    %v886 = vmul.f32 %v856, %v870
    %v887 = vmul.f32 %v852, %v871
    %v888 = vmul.f32 %v864, %v872
    %v889 = vmul.f32 %v861, %v869
    %v890 = vmul.f32 %v857, %v870
    %v891 = vmul.f32 %v853, %v871
    %v892 = vmul.f32 %v865, %v872
    %v893 = vpack.c.bf16 %v878, %v877
    %v894 = vpack.c.bf16 %v880, %v879
    %v895 = vpack.c.bf16 %v882, %v881
    %v896 = vpack.c.bf16 %v884, %v883
    %v897 = vpack.c.bf16 %v886, %v885
    %v898 = vpack.c.bf16 %v888, %v887
    %v899 = vpack.c.bf16 %v890, %v889
    %v900 = vpack.c.bf16 %v892, %v891
    %901 = vst [vmem:[#allocation2 + $0x140] sm:$0xff] %v893
    %902 = vst [vmem:[#allocation2 + $0x148] sm:$0xff] %v894
    %903 = vst [vmem:[#allocation2 + $0x150] sm:$0xff] %v895
    %904 = vst [vmem:[#allocation2 + $0x158] sm:$0xff] %v896
    %905 = vst [vmem:[#allocation2 + $0x160] sm:$0xff] %v897
    %906 = vst [vmem:[#allocation2 + $0x168] sm:$0xff] %v898
    %907 = vst [vmem:[#allocation2 + $0x170] sm:$0xff] %v899
    %908 = vst [vmem:[#allocation2 + $0x178] sm:$0xff] %v900
    %909 = vrot.lane.b32.xlu0 %v416, 98
    %v910 = vpop.permute.xlu0 %909
    %911 = vrot.lane.b32.xlu0 %v420, 98
    %v912 = vpop.permute.xlu0 %911
    %913 = vrot.lane.b32.xlu0 %v424, 98
    %v914 = vpop.permute.xlu0 %913
    %915 = vrot.lane.b32.xlu0 %v428, 98
    %v916 = vpop.permute.xlu0 %915
    %917 = vrot.lane.b32.xlu0 %v417, 98
    %v918 = vpop.permute.xlu0 %917
    %919 = vrot.lane.b32.xlu0 %v421, 98
    %v920 = vpop.permute.xlu0 %919
    %921 = vrot.lane.b32.xlu0 %v425, 98
    %v922 = vpop.permute.xlu0 %921
    %923 = vrot.lane.b32.xlu0 %v429, 98
    %v924 = vpop.permute.xlu0 %923
    %925 = vrot.lane.b32.xlu0 %v418, 98
    %v926 = vpop.permute.xlu0 %925
    %927 = vrot.lane.b32.xlu0 %v422, 98
    %v928 = vpop.permute.xlu0 %927
    %929 = vrot.lane.b32.xlu0 %v426, 98
    %v930 = vpop.permute.xlu0 %929
    %931 = vrot.lane.b32.xlu0 %v430, 98
    %v932 = vpop.permute.xlu0 %931
    %933 = vrot.lane.b32.xlu0 %v419, 98
    %v934 = vpop.permute.xlu0 %933
    %935 = vrot.lane.b32.xlu0 %v423, 98
    %v936 = vpop.permute.xlu0 %935
    %937 = vrot.lane.b32.xlu0 %v427, 98
    %v938 = vpop.permute.xlu0 %937
    %939 = vrot.lane.b32.xlu0 %v431, 98
    %v940 = vpop.permute.xlu0 %939
    %vm941 = vcmp.lt.s32.totalorder %v465, 98
    %v942 = vsel %vm941, %v926, %v934
    %v943 = vsel %vm941, %v928, %v936
    %v944 = vsel %vm941, %v930, %v938
    %v945 = vsel %vm941, %v932, %v940
    %v946 = vsel %vm941, %v918, %v926
    %v947 = vsel %vm941, %v920, %v928
    %v948 = vsel %vm941, %v922, %v930
    %v949 = vsel %vm941, %v924, %v932
    %v950 = vsel %vm941, %v910, %v918
    %v951 = vsel %vm941, %v912, %v920
    %v952 = vsel %vm941, %v914, %v922
    %v953 = vsel %vm941, %v916, %v924
    %v954 = vsel %vm941, %v934, %v910
    %v955 = vsel %vm941, %v936, %v912
    %v956 = vsel %vm941, %v938, %v914
    %v957 = vsel %vm941, %v940, %v916
    %s958 = scalar_lea.vmem %s10, 6
    %v959 = vld [vmem:[%s958] ss:$8 sm:$0xf]
    %v961 = vperm.slane %v959, 0
    %v962 = vperm.slane %v959, 1
    %v963 = vperm.slane %v959, 2
    %v964 = vperm.slane %v959, 3
    %v969 = vmul.f32 %v950, %v961
    %v970 = vmul.f32 %v946, %v962
    %v971 = vmul.f32 %v942, %v963
    %v972 = vmul.f32 %v954, %v964
    %v973 = vmul.f32 %v951, %v961
    %v974 = vmul.f32 %v947, %v962
    %v975 = vmul.f32 %v943, %v963
    %v976 = vmul.f32 %v955, %v964
    %v977 = vmul.f32 %v952, %v961
    %v978 = vmul.f32 %v948, %v962
    %v979 = vmul.f32 %v944, %v963
    %v980 = vmul.f32 %v956, %v964
    %v981 = vmul.f32 %v953, %v961
    %v982 = vmul.f32 %v949, %v962
    %v983 = vmul.f32 %v945, %v963
    %v984 = vmul.f32 %v957, %v964
    %v985 = vpack.c.bf16 %v970, %v969
    %v986 = vpack.c.bf16 %v972, %v971
    %v987 = vpack.c.bf16 %v974, %v973
    %v988 = vpack.c.bf16 %v976, %v975
    %v989 = vpack.c.bf16 %v978, %v977
    %v990 = vpack.c.bf16 %v980, %v979
    %v991 = vpack.c.bf16 %v982, %v981
    %v992 = vpack.c.bf16 %v984, %v983
    %993 = vst [vmem:[#allocation2 + $0x180] sm:$0xff] %v985
    %994 = vst [vmem:[#allocation2 + $0x188] sm:$0xff] %v986
    %995 = vst [vmem:[#allocation2 + $0x190] sm:$0xff] %v987
    %996 = vst [vmem:[#allocation2 + $0x198] sm:$0xff] %v988
    %997 = vst [vmem:[#allocation2 + $0x1a0] sm:$0xff] %v989
    %998 = vst [vmem:[#allocation2 + $0x1a8] sm:$0xff] %v990
    %999 = vst [vmem:[#allocation2 + $0x1b0] sm:$0xff] %v991
    %1000 = vst [vmem:[#allocation2 + $0x1b8] sm:$0xff] %v992
    %1001 = vrot.lane.b32.xlu0 %v416, 96
    %v1002 = vpop.permute.xlu0 %1001
    %1003 = vrot.lane.b32.xlu0 %v420, 96
    %v1004 = vpop.permute.xlu0 %1003
    %1005 = vrot.lane.b32.xlu0 %v424, 96
    %v1006 = vpop.permute.xlu0 %1005
    %1007 = vrot.lane.b32.xlu0 %v428, 96
    %v1008 = vpop.permute.xlu0 %1007
    %1009 = vrot.lane.b32.xlu0 %v417, 96
    %v1010 = vpop.permute.xlu0 %1009
    %1011 = vrot.lane.b32.xlu0 %v421, 96
    %v1012 = vpop.permute.xlu0 %1011
    %1013 = vrot.lane.b32.xlu0 %v425, 96
    %v1014 = vpop.permute.xlu0 %1013
    %1015 = vrot.lane.b32.xlu0 %v429, 96
    %v1016 = vpop.permute.xlu0 %1015
    %1017 = vrot.lane.b32.xlu0 %v418, 96
    %v1018 = vpop.permute.xlu0 %1017
    %1019 = vrot.lane.b32.xlu0 %v422, 96
    %v1020 = vpop.permute.xlu0 %1019
    %1021 = vrot.lane.b32.xlu0 %v426, 96
    %v1022 = vpop.permute.xlu0 %1021
    %1023 = vrot.lane.b32.xlu0 %v430, 96
    %v1024 = vpop.permute.xlu0 %1023
    %1025 = vrot.lane.b32.xlu0 %v419, 96
    %v1026 = vpop.permute.xlu0 %1025
    %1027 = vrot.lane.b32.xlu0 %v423, 96
    %v1028 = vpop.permute.xlu0 %1027
    %1029 = vrot.lane.b32.xlu0 %v427, 96
    %v1030 = vpop.permute.xlu0 %1029
    %1031 = vrot.lane.b32.xlu0 %v431, 96
    %v1032 = vpop.permute.xlu0 %1031
    %vm1033 = vcmp.lt.s32.totalorder %v465, 96
    %v1034 = vsel %vm1033, %v1018, %v1026
    %v1035 = vsel %vm1033, %v1020, %v1028
    %v1036 = vsel %vm1033, %v1022, %v1030
    %v1037 = vsel %vm1033, %v1024, %v1032
    %v1038 = vsel %vm1033, %v1010, %v1018
    %v1039 = vsel %vm1033, %v1012, %v1020
    %v1040 = vsel %vm1033, %v1014, %v1022
    %v1041 = vsel %vm1033, %v1016, %v1024
    %v1042 = vsel %vm1033, %v1002, %v1010
    %v1043 = vsel %vm1033, %v1004, %v1012
    %v1044 = vsel %vm1033, %v1006, %v1014
    %v1045 = vsel %vm1033, %v1008, %v1016
    %v1046 = vsel %vm1033, %v1026, %v1002
    %v1047 = vsel %vm1033, %v1028, %v1004
    %v1048 = vsel %vm1033, %v1030, %v1006
    %v1049 = vsel %vm1033, %v1032, %v1008
    %s1050 = scalar_lea.vmem %s10, 7
    %v1051 = vld [vmem:[%s1050] ss:$8 sm:$0xf]
    %v1053 = vperm.slane %v1051, 0
    %v1054 = vperm.slane %v1051, 1
    %v1055 = vperm.slane %v1051, 2
    %v1056 = vperm.slane %v1051, 3
    %v1061 = vmul.f32 %v1042, %v1053
    %v1062 = vmul.f32 %v1038, %v1054
    %v1063 = vmul.f32 %v1034, %v1055
    %v1064 = vmul.f32 %v1046, %v1056
    %v1065 = vmul.f32 %v1043, %v1053
    %v1066 = vmul.f32 %v1039, %v1054
    %v1067 = vmul.f32 %v1035, %v1055
    %v1068 = vmul.f32 %v1047, %v1056
    %v1069 = vmul.f32 %v1044, %v1053
    %v1070 = vmul.f32 %v1040, %v1054
    %v1071 = vmul.f32 %v1036, %v1055
    %v1072 = vmul.f32 %v1048, %v1056
    %v1073 = vmul.f32 %v1045, %v1053
    %v1074 = vmul.f32 %v1041, %v1054
    %v1075 = vmul.f32 %v1037, %v1055
    %v1076 = vmul.f32 %v1049, %v1056
    %v1077 = vpack.c.bf16 %v1062, %v1061
    %v1078 = vpack.c.bf16 %v1064, %v1063
    %v1079 = vpack.c.bf16 %v1066, %v1065
    %v1080 = vpack.c.bf16 %v1068, %v1067
    %v1081 = vpack.c.bf16 %v1070, %v1069
    %v1082 = vpack.c.bf16 %v1072, %v1071
    %v1083 = vpack.c.bf16 %v1074, %v1073
    %v1084 = vpack.c.bf16 %v1076, %v1075
    %1085 = vst [vmem:[#allocation2 + $0x1c0] sm:$0xff] %v1077
    %1086 = vst [vmem:[#allocation2 + $0x1c8] sm:$0xff] %v1078
    %1087 = vst [vmem:[#allocation2 + $0x1d0] sm:$0xff] %v1079
    %1088 = vst [vmem:[#allocation2 + $0x1d8] sm:$0xff] %v1080
    %1089 = vst [vmem:[#allocation2 + $0x1e0] sm:$0xff] %v1081
    %1090 = vst [vmem:[#allocation2 + $0x1e8] sm:$0xff] %v1082
    %1091 = vst [vmem:[#allocation2 + $0x1f0] sm:$0xff] %v1083
    %1092 = vst [vmem:[#allocation2 + $0x1f8] sm:$0xff] %v1084
    %1093 = vrot.lane.b32.xlu0 %v416, 94
    %v1094 = vpop.permute.xlu0 %1093
    %1095 = vrot.lane.b32.xlu0 %v420, 94
    %v1096 = vpop.permute.xlu0 %1095
    %1097 = vrot.lane.b32.xlu0 %v424, 94
    %v1098 = vpop.permute.xlu0 %1097
    %1099 = vrot.lane.b32.xlu0 %v428, 94
    %v1100 = vpop.permute.xlu0 %1099
    %1101 = vrot.lane.b32.xlu0 %v417, 94
    %v1102 = vpop.permute.xlu0 %1101
    %1103 = vrot.lane.b32.xlu0 %v421, 94
    %v1104 = vpop.permute.xlu0 %1103
    %1105 = vrot.lane.b32.xlu0 %v425, 94
    %v1106 = vpop.permute.xlu0 %1105
    %1107 = vrot.lane.b32.xlu0 %v429, 94
    %v1108 = vpop.permute.xlu0 %1107
    %1109 = vrot.lane.b32.xlu0 %v418, 94
    %v1110 = vpop.permute.xlu0 %1109
    %1111 = vrot.lane.b32.xlu0 %v422, 94
    %v1112 = vpop.permute.xlu0 %1111
    %1113 = vrot.lane.b32.xlu0 %v426, 94
    %v1114 = vpop.permute.xlu0 %1113
    %1115 = vrot.lane.b32.xlu0 %v430, 94
    %v1116 = vpop.permute.xlu0 %1115
    %1117 = vrot.lane.b32.xlu0 %v419, 94
    %v1118 = vpop.permute.xlu0 %1117
    %1119 = vrot.lane.b32.xlu0 %v423, 94
    %v1120 = vpop.permute.xlu0 %1119
    %1121 = vrot.lane.b32.xlu0 %v427, 94
    %v1122 = vpop.permute.xlu0 %1121
    %1123 = vrot.lane.b32.xlu0 %v431, 94
    %v1124 = vpop.permute.xlu0 %1123
    %vm1125 = vcmp.lt.s32.totalorder %v465, 94
    %v1126 = vsel %vm1125, %v1110, %v1118
    %v1127 = vsel %vm1125, %v1112, %v1120
    %v1128 = vsel %vm1125, %v1114, %v1122
    %v1129 = vsel %vm1125, %v1116, %v1124
    %v1130 = vsel %vm1125, %v1102, %v1110
    %v1131 = vsel %vm1125, %v1104, %v1112
    %v1132 = vsel %vm1125, %v1106, %v1114
    %v1133 = vsel %vm1125, %v1108, %v1116
    %v1134 = vsel %vm1125, %v1094, %v1102
    %v1135 = vsel %vm1125, %v1096, %v1104
    %v1136 = vsel %vm1125, %v1098, %v1106
    %v1137 = vsel %vm1125, %v1100, %v1108
    %v1138 = vsel %vm1125, %v1118, %v1094
    %v1139 = vsel %vm1125, %v1120, %v1096
    %v1140 = vsel %vm1125, %v1122, %v1098
    %v1141 = vsel %vm1125, %v1124, %v1100
    %s1142 = scalar_lea.vmem %s10, 32
    %v1143 = vld [vmem:[%s1142] ss:$8 sm:$0xf]
    %v1145 = vperm.slane %v1143, 0
    %v1146 = vperm.slane %v1143, 1
    %v1147 = vperm.slane %v1143, 2
    %v1148 = vperm.slane %v1143, 3
    %v1153 = vmul.f32 %v1134, %v1145
    %v1154 = vmul.f32 %v1130, %v1146
    %v1155 = vmul.f32 %v1126, %v1147
    %v1156 = vmul.f32 %v1138, %v1148
    %v1157 = vmul.f32 %v1135, %v1145
    %v1158 = vmul.f32 %v1131, %v1146
    %v1159 = vmul.f32 %v1127, %v1147
    %v1160 = vmul.f32 %v1139, %v1148
    %v1161 = vmul.f32 %v1136, %v1145
    %v1162 = vmul.f32 %v1132, %v1146
    %v1163 = vmul.f32 %v1128, %v1147
    %v1164 = vmul.f32 %v1140, %v1148
    %v1165 = vmul.f32 %v1137, %v1145
    %v1166 = vmul.f32 %v1133, %v1146
    %v1167 = vmul.f32 %v1129, %v1147
    %v1168 = vmul.f32 %v1141, %v1148
    %v1169 = vpack.c.bf16 %v1154, %v1153
    %v1170 = vpack.c.bf16 %v1156, %v1155
    %v1171 = vpack.c.bf16 %v1158, %v1157
    %v1172 = vpack.c.bf16 %v1160, %v1159
    %v1173 = vpack.c.bf16 %v1162, %v1161
    %v1174 = vpack.c.bf16 %v1164, %v1163
    %v1175 = vpack.c.bf16 %v1166, %v1165
    %v1176 = vpack.c.bf16 %v1168, %v1167
    %1177 = vst [vmem:[#allocation2 + $0x200] sm:$0xff] %v1169
    %1178 = vst [vmem:[#allocation2 + $0x208] sm:$0xff] %v1170
    %1179 = vst [vmem:[#allocation2 + $0x210] sm:$0xff] %v1171
    %1180 = vst [vmem:[#allocation2 + $0x218] sm:$0xff] %v1172
    %1181 = vst [vmem:[#allocation2 + $0x220] sm:$0xff] %v1173
    %1182 = vst [vmem:[#allocation2 + $0x228] sm:$0xff] %v1174
    %1183 = vst [vmem:[#allocation2 + $0x230] sm:$0xff] %v1175
    %1184 = vst [vmem:[#allocation2 + $0x238] sm:$0xff] %v1176
    %v1185 = vld [vmem:[%s4] sm:$0xff]
    %v1186 = vld [vmem:[%s4 + $0x8] sm:$0xf]
    %v1187 = vld [vmem:[%s4 + $0xc] sm:$0xff]
    %v1188 = vld [vmem:[%s4 + $0x14] sm:$0xf]
    %v1189 = vld [vmem:[%s4 + $0x18] sm:$0xff]
    %v1190 = vld [vmem:[%s4 + $0x20] sm:$0xf]
    %v1191 = vld [vmem:[%s4 + $0x24] sm:$0xff]
    %v1192 = vld [vmem:[%s4 + $0x2c] sm:$0xf]
    %v1193 = vld [vmem:[#allocation2] sm:$0xff]
    %v1194 = vld [vmem:[#allocation2 + $0x8] sm:$0xff]
    %v1195 = vld [vmem:[#allocation2 + $0x10] sm:$0xff]
    %v1196 = vld [vmem:[#allocation2 + $0x18] sm:$0xff]
    %v1197 = vld [vmem:[#allocation2 + $0x20] sm:$0xff]
    %v1198 = vld [vmem:[#allocation2 + $0x28] sm:$0xff]
    %v1199 = vld [vmem:[#allocation2 + $0x30] sm:$0xff]
    %v1200 = vld [vmem:[#allocation2 + $0x38] sm:$0xff]
    %v1201 = vld [vmem:[#allocation2 + $0x40] sm:$0xff]
    %v1202 = vld [vmem:[#allocation2 + $0x48] sm:$0xff]
    %v1203 = vld [vmem:[#allocation2 + $0x50] sm:$0xff]
    %v1204 = vld [vmem:[#allocation2 + $0x58] sm:$0xff]
    %v1205 = vld [vmem:[#allocation2 + $0x60] sm:$0xff]
    %v1206 = vld [vmem:[#allocation2 + $0x68] sm:$0xff]
    %v1207 = vld [vmem:[#allocation2 + $0x70] sm:$0xff]
    %v1208 = vld [vmem:[#allocation2 + $0x78] sm:$0xff]
    %v1209 = vld [vmem:[#allocation2 + $0x80] sm:$0xff]
    %v1210 = vld [vmem:[#allocation2 + $0x88] sm:$0xff]
    %v1211 = vld [vmem:[#allocation2 + $0x90] sm:$0xff]
    %v1212 = vld [vmem:[#allocation2 + $0x98] sm:$0xff]
    %v1213 = vld [vmem:[#allocation2 + $0xa0] sm:$0xff]
    %v1214 = vld [vmem:[#allocation2 + $0xa8] sm:$0xff]
    %v1215 = vld [vmem:[#allocation2 + $0xb0] sm:$0xff]
    %v1216 = vld [vmem:[#allocation2 + $0xb8] sm:$0xff]
    %v1217 = vld [vmem:[#allocation2 + $0xc0] sm:$0xff]
    %v1218 = vld [vmem:[#allocation2 + $0xc8] sm:$0xff]
    %v1219 = vld [vmem:[#allocation2 + $0xd0] sm:$0xff]
    %v1220 = vld [vmem:[#allocation2 + $0xd8] sm:$0xff]
    %v1221 = vld [vmem:[#allocation2 + $0xe0] sm:$0xff]
    %v1222 = vld [vmem:[#allocation2 + $0xe8] sm:$0xff]
    %v1223 = vld [vmem:[#allocation2 + $0xf0] sm:$0xff]
    %v1224 = vld [vmem:[#allocation2 + $0xf8] sm:$0xff]
    %v1225 = vld [vmem:[#allocation2 + $0x100] sm:$0xff]
    %v1226 = vld [vmem:[#allocation2 + $0x108] sm:$0xff]
    %v1227 = vld [vmem:[#allocation2 + $0x110] sm:$0xff]
    %v1228 = vld [vmem:[#allocation2 + $0x118] sm:$0xff]
    %v1229 = vld [vmem:[#allocation2 + $0x120] sm:$0xff]
    %v1230 = vld [vmem:[#allocation2 + $0x128] sm:$0xff]
    %v1231 = vld [vmem:[#allocation2 + $0x130] sm:$0xff]
    %v1232 = vld [vmem:[#allocation2 + $0x138] sm:$0xff]
    %v1233 = vld [vmem:[#allocation2 + $0x140] sm:$0xff]
    %v1234 = vld [vmem:[#allocation2 + $0x148] sm:$0xff]
    %v1235 = vld [vmem:[#allocation2 + $0x150] sm:$0xff]
    %v1236 = vld [vmem:[#allocation2 + $0x158] sm:$0xff]
    %v1237 = vld [vmem:[#allocation2 + $0x160] sm:$0xff]
    %v1238 = vld [vmem:[#allocation2 + $0x168] sm:$0xff]
    %v1239 = vld [vmem:[#allocation2 + $0x170] sm:$0xff]
    %v1240 = vld [vmem:[#allocation2 + $0x178] sm:$0xff]
    %v1241 = vld [vmem:[#allocation2 + $0x180] sm:$0xff]
    %v1242 = vld [vmem:[#allocation2 + $0x188] sm:$0xff]
    %v1243 = vld [vmem:[#allocation2 + $0x190] sm:$0xff]
    %v1244 = vld [vmem:[#allocation2 + $0x198] sm:$0xff]
    %v1245 = vld [vmem:[#allocation2 + $0x1a0] sm:$0xff]
    %v1246 = vld [vmem:[#allocation2 + $0x1a8] sm:$0xff]
    %v1247 = vld [vmem:[#allocation2 + $0x1b0] sm:$0xff]
    %v1248 = vld [vmem:[#allocation2 + $0x1b8] sm:$0xff]
    %v1249 = vld [vmem:[#allocation2 + $0x1c0] sm:$0xff]
    %v1250 = vld [vmem:[#allocation2 + $0x1c8] sm:$0xff]
    %v1251 = vld [vmem:[#allocation2 + $0x1d0] sm:$0xff]
    %v1252 = vld [vmem:[#allocation2 + $0x1d8] sm:$0xff]
    %v1253 = vld [vmem:[#allocation2 + $0x1e0] sm:$0xff]
    %v1254 = vld [vmem:[#allocation2 + $0x1e8] sm:$0xff]
    %v1255 = vld [vmem:[#allocation2 + $0x1f0] sm:$0xff]
    %v1256 = vld [vmem:[#allocation2 + $0x1f8] sm:$0xff]
    %v1257 = vld [vmem:[#allocation2 + $0x200] sm:$0xff]
    %v1258 = vld [vmem:[#allocation2 + $0x208] sm:$0xff]
    %v1259 = vld [vmem:[#allocation2 + $0x210] sm:$0xff]
    %v1260 = vld [vmem:[#allocation2 + $0x218] sm:$0xff]
    %v1261 = vld [vmem:[#allocation2 + $0x220] sm:$0xff]
    %v1262 = vld [vmem:[#allocation2 + $0x228] sm:$0xff]
    %v1263 = vld [vmem:[#allocation2 + $0x230] sm:$0xff]
    %v1264 = vld [vmem:[#allocation2 + $0x238] sm:$0xff]
    %v1273 = vunpack.c.l.b16 %v1185
    %v1274 = vunpack.c.h.b16 %v1185
    %v1275 = vunpack.c.l.b16 %v1186
    %v1276 = vunpack.c.l.b16 %v1187
    %v1277 = vunpack.c.h.b16 %v1187
    %v1278 = vunpack.c.l.b16 %v1188
    %v1279 = vunpack.c.l.b16 %v1189
    %v1280 = vunpack.c.h.b16 %v1189
    %v1281 = vunpack.c.l.b16 %v1190
    %v1282 = vunpack.c.l.b16 %v1191
    %v1283 = vunpack.c.h.b16 %v1191
    %v1284 = vunpack.c.l.b16 %v1192
    %v1285 = vpack.c.b16 %v1276, %v1273
    %v1286 = vpack.c.b16 %v1277, %v1274
    %v1287 = vpack.c.b16 %v1278, %v1275
    %v1288 = vpack.c.b16 %v1282, %v1279
    %v1289 = vpack.c.b16 %v1283, %v1280
    %v1290 = vpack.c.b16 %v1284, %v1281
    %v1367 = vunpack.c.l.b16 %v1193
    %v1368 = vunpack.c.h.b16 %v1193
    %v1369 = vunpack.c.l.b16 %v1194
    %v1370 = vunpack.c.h.b16 %v1194
    %v1371 = vunpack.c.l.b16 %v1195
    %v1372 = vunpack.c.h.b16 %v1195
    %v1373 = vunpack.c.l.b16 %v1196
    %v1374 = vunpack.c.h.b16 %v1196
    %v1375 = vunpack.c.l.b16 %v1197
    %v1376 = vunpack.c.h.b16 %v1197
    %v1377 = vunpack.c.l.b16 %v1198
    %v1378 = vunpack.c.h.b16 %v1198
    %v1379 = vunpack.c.l.b16 %v1199
    %v1380 = vunpack.c.h.b16 %v1199
    %v1381 = vunpack.c.l.b16 %v1200
    %v1382 = vunpack.c.h.b16 %v1200
    %v1383 = vunpack.c.l.b16 %v1201
    %v1384 = vunpack.c.h.b16 %v1201
    %v1385 = vunpack.c.l.b16 %v1202
    %v1386 = vunpack.c.h.b16 %v1202
    %v1387 = vunpack.c.l.b16 %v1203
    %v1388 = vunpack.c.h.b16 %v1203
    %v1389 = vunpack.c.l.b16 %v1204
    %v1390 = vunpack.c.h.b16 %v1204
    %v1391 = vunpack.c.l.b16 %v1205
    %v1392 = vunpack.c.h.b16 %v1205
    %v1393 = vunpack.c.l.b16 %v1206
    %v1394 = vunpack.c.h.b16 %v1206
    %v1395 = vunpack.c.l.b16 %v1207
    %v1396 = vunpack.c.h.b16 %v1207
    %v1397 = vunpack.c.l.b16 %v1208
    %v1398 = vunpack.c.h.b16 %v1208
    %v1399 = vunpack.c.l.b16 %v1209
    %v1400 = vunpack.c.h.b16 %v1209
    %v1401 = vunpack.c.l.b16 %v1210
    %v1402 = vunpack.c.h.b16 %v1210
    %v1403 = vunpack.c.l.b16 %v1211
    %v1404 = vunpack.c.h.b16 %v1211
    %v1405 = vunpack.c.l.b16 %v1212
    %v1406 = vunpack.c.h.b16 %v1212
    %v1407 = vunpack.c.l.b16 %v1213
    %v1408 = vunpack.c.h.b16 %v1213
    %v1409 = vunpack.c.l.b16 %v1214
    %v1410 = vunpack.c.h.b16 %v1214
    %v1411 = vunpack.c.l.b16 %v1215
    %v1412 = vunpack.c.h.b16 %v1215
    %v1413 = vunpack.c.l.b16 %v1216
    %v1414 = vunpack.c.h.b16 %v1216
    %v1415 = vunpack.c.l.b16 %v1217
    %v1416 = vunpack.c.h.b16 %v1217
    %v1417 = vunpack.c.l.b16 %v1218
    %v1418 = vunpack.c.h.b16 %v1218
    %v1419 = vunpack.c.l.b16 %v1219
    %v1420 = vunpack.c.h.b16 %v1219
    %v1421 = vunpack.c.l.b16 %v1220
    %v1422 = vunpack.c.h.b16 %v1220
    %v1423 = vunpack.c.l.b16 %v1221
    %v1424 = vunpack.c.h.b16 %v1221
    %v1425 = vunpack.c.l.b16 %v1222
    %v1426 = vunpack.c.h.b16 %v1222
    %v1427 = vunpack.c.l.b16 %v1223
    %v1428 = vunpack.c.h.b16 %v1223
    %v1429 = vunpack.c.l.b16 %v1224
    %v1430 = vunpack.c.h.b16 %v1224
    %v1431 = vunpack.c.l.b16 %v1225
    %v1432 = vunpack.c.h.b16 %v1225
    %v1433 = vunpack.c.l.b16 %v1226
    %v1434 = vunpack.c.h.b16 %v1226
    %v1435 = vunpack.c.l.b16 %v1227
    %v1436 = vunpack.c.h.b16 %v1227
    %v1437 = vunpack.c.l.b16 %v1228
    %v1438 = vunpack.c.h.b16 %v1228
    %v1439 = vunpack.c.l.b16 %v1229
    %v1440 = vunpack.c.h.b16 %v1229
    %v1441 = vunpack.c.l.b16 %v1230
    %v1442 = vunpack.c.h.b16 %v1230
    %v1443 = vunpack.c.l.b16 %v1231
    %v1444 = vunpack.c.h.b16 %v1231
    %v1445 = vunpack.c.l.b16 %v1232
    %v1446 = vunpack.c.h.b16 %v1232
    %v1447 = vunpack.c.l.b16 %v1233
    %v1448 = vunpack.c.h.b16 %v1233
    %v1449 = vunpack.c.l.b16 %v1234
    %v1450 = vunpack.c.h.b16 %v1234
    %v1451 = vunpack.c.l.b16 %v1235
    %v1452 = vunpack.c.h.b16 %v1235
    %v1453 = vunpack.c.l.b16 %v1236
    %v1454 = vunpack.c.h.b16 %v1236
    %v1455 = vunpack.c.l.b16 %v1237
    %v1456 = vunpack.c.h.b16 %v1237
    %v1457 = vunpack.c.l.b16 %v1238
    %v1458 = vunpack.c.h.b16 %v1238
    %v1459 = vunpack.c.l.b16 %v1239
    %v1460 = vunpack.c.h.b16 %v1239
    %v1461 = vunpack.c.l.b16 %v1240
    %v1462 = vunpack.c.h.b16 %v1240
    %v1463 = vunpack.c.l.b16 %v1241
    %v1464 = vunpack.c.h.b16 %v1241
    %v1465 = vunpack.c.l.b16 %v1242
    %v1466 = vunpack.c.h.b16 %v1242
    %v1467 = vunpack.c.l.b16 %v1243
    %v1468 = vunpack.c.h.b16 %v1243
    %v1469 = vunpack.c.l.b16 %v1244
    %v1470 = vunpack.c.h.b16 %v1244
    %v1471 = vunpack.c.l.b16 %v1245
    %v1472 = vunpack.c.h.b16 %v1245
    %v1473 = vunpack.c.l.b16 %v1246
    %v1474 = vunpack.c.h.b16 %v1246
    %v1475 = vunpack.c.l.b16 %v1247
    %v1476 = vunpack.c.h.b16 %v1247
    %v1477 = vunpack.c.l.b16 %v1248
    %v1478 = vunpack.c.h.b16 %v1248
    %v1479 = vunpack.c.l.b16 %v1249
    %v1480 = vunpack.c.h.b16 %v1249
    %v1481 = vunpack.c.l.b16 %v1250
    %v1482 = vunpack.c.h.b16 %v1250
    %v1483 = vunpack.c.l.b16 %v1251
    %v1484 = vunpack.c.h.b16 %v1251
    %v1485 = vunpack.c.l.b16 %v1252
    %v1486 = vunpack.c.h.b16 %v1252
    %v1487 = vunpack.c.l.b16 %v1253
    %v1488 = vunpack.c.h.b16 %v1253
    %v1489 = vunpack.c.l.b16 %v1254
    %v1490 = vunpack.c.h.b16 %v1254
    %v1491 = vunpack.c.l.b16 %v1255
    %v1492 = vunpack.c.h.b16 %v1255
    %v1493 = vunpack.c.l.b16 %v1256
    %v1494 = vunpack.c.h.b16 %v1256
    %v1495 = vunpack.c.l.b16 %v1257
    %v1496 = vunpack.c.h.b16 %v1257
    %v1497 = vunpack.c.l.b16 %v1258
    %v1498 = vunpack.c.h.b16 %v1258
    %v1499 = vunpack.c.l.b16 %v1259
    %v1500 = vunpack.c.h.b16 %v1259
    %v1501 = vunpack.c.l.b16 %v1260
    %v1502 = vunpack.c.h.b16 %v1260
    %v1503 = vunpack.c.l.b16 %v1261
    %v1504 = vunpack.c.h.b16 %v1261
    %v1505 = vunpack.c.l.b16 %v1262
    %v1506 = vunpack.c.h.b16 %v1262
    %v1507 = vunpack.c.l.b16 %v1263
    %v1508 = vunpack.c.h.b16 %v1263
    %v1509 = vunpack.c.l.b16 %v1264
    %v1510 = vunpack.c.h.b16 %v1264
    %v1511 = vpack.c.b16 %v1371, %v1367
    %v1512 = vpack.c.b16 %v1372, %v1368
    %v1513 = vpack.c.b16 %v1373, %v1369
    %v1514 = vpack.c.b16 %v1374, %v1370
    %v1515 = vpack.c.b16 %v1379, %v1375
    %v1516 = vpack.c.b16 %v1380, %v1376
    %v1517 = vpack.c.b16 %v1381, %v1377
    %v1518 = vpack.c.b16 %v1382, %v1378
    %v1519 = vpack.c.b16 %v1387, %v1383
    %v1520 = vpack.c.b16 %v1388, %v1384
    %v1521 = vpack.c.b16 %v1389, %v1385
    %v1522 = vpack.c.b16 %v1390, %v1386
    %v1523 = vpack.c.b16 %v1395, %v1391
    %v1524 = vpack.c.b16 %v1396, %v1392
    %v1525 = vpack.c.b16 %v1397, %v1393
    %v1526 = vpack.c.b16 %v1398, %v1394
    %v1527 = vpack.c.b16 %v1403, %v1399
    %v1528 = vpack.c.b16 %v1404, %v1400
    %v1529 = vpack.c.b16 %v1405, %v1401
    %v1530 = vpack.c.b16 %v1406, %v1402
    %v1531 = vpack.c.b16 %v1411, %v1407
    %v1532 = vpack.c.b16 %v1412, %v1408
    %v1533 = vpack.c.b16 %v1413, %v1409
    %v1534 = vpack.c.b16 %v1414, %v1410
    %v1535 = vpack.c.b16 %v1419, %v1415
    %v1536 = vpack.c.b16 %v1420, %v1416
    %v1537 = vpack.c.b16 %v1421, %v1417
    %v1538 = vpack.c.b16 %v1422, %v1418
    %v1539 = vpack.c.b16 %v1427, %v1423
    %v1540 = vpack.c.b16 %v1428, %v1424
    %v1541 = vpack.c.b16 %v1429, %v1425
    %v1542 = vpack.c.b16 %v1430, %v1426
    %v1543 = vpack.c.b16 %v1435, %v1431
    %v1544 = vpack.c.b16 %v1436, %v1432
    %v1545 = vpack.c.b16 %v1437, %v1433
    %v1546 = vpack.c.b16 %v1438, %v1434
    %v1547 = vpack.c.b16 %v1443, %v1439
    %v1548 = vpack.c.b16 %v1444, %v1440
    %v1549 = vpack.c.b16 %v1445, %v1441
    %v1550 = vpack.c.b16 %v1446, %v1442
    %v1551 = vpack.c.b16 %v1451, %v1447
    %v1552 = vpack.c.b16 %v1452, %v1448
    %v1553 = vpack.c.b16 %v1453, %v1449
    %v1554 = vpack.c.b16 %v1454, %v1450
    %v1555 = vpack.c.b16 %v1459, %v1455
    %v1556 = vpack.c.b16 %v1460, %v1456
    %v1557 = vpack.c.b16 %v1461, %v1457
    %v1558 = vpack.c.b16 %v1462, %v1458
    %v1559 = vpack.c.b16 %v1467, %v1463
    %v1560 = vpack.c.b16 %v1468, %v1464
    %v1561 = vpack.c.b16 %v1469, %v1465
    %v1562 = vpack.c.b16 %v1470, %v1466
    %v1563 = vpack.c.b16 %v1475, %v1471
    %v1564 = vpack.c.b16 %v1476, %v1472
    %v1565 = vpack.c.b16 %v1477, %v1473
    %v1566 = vpack.c.b16 %v1478, %v1474
    %v1567 = vpack.c.b16 %v1483, %v1479
    %v1568 = vpack.c.b16 %v1484, %v1480
    %v1569 = vpack.c.b16 %v1485, %v1481
    %v1570 = vpack.c.b16 %v1486, %v1482
    %v1571 = vpack.c.b16 %v1491, %v1487
    %v1572 = vpack.c.b16 %v1492, %v1488
    %v1573 = vpack.c.b16 %v1493, %v1489
    %v1574 = vpack.c.b16 %v1494, %v1490
    %v1575 = vpack.c.b16 %v1499, %v1495
    %v1576 = vpack.c.b16 %v1500, %v1496
    %v1577 = vpack.c.b16 %v1501, %v1497
    %v1578 = vpack.c.b16 %v1502, %v1498
    %v1579 = vpack.c.b16 %v1507, %v1503
    %v1580 = vpack.c.b16 %v1508, %v1504
    %v1581 = vpack.c.b16 %v1509, %v1505
    %v1582 = vpack.c.b16 %v1510, %v1506
    %vm1655 = vcmask 261120
    %v1657 = vsel %vm1655, %v1287, 0
    %v1660 = vsel %vm1655, %v1290, 0
    %1662 = vmatpush.bf16.msra.mxu0 %v1539
    %1663 = vmatpush.bf16.msra.mxu0 %v1535
    %1664 = vmatpush.bf16.msra.mxu0 %v1531
    %1665 = vmatpush.bf16.msra.mxu0 %v1527
    %1666 = vmatpush.bf16.msra.mxu0 %v1523
    %1667 = vmatpush.bf16.msra.mxu0 %v1519
    %1668 = vmatpush.bf16.msra.mxu0 %v1515
    %1669 = vmatpush.bf16.msra.mxu0 %v1511
    %1670 = vmatmul.bf16.gmra.mxu0 %v1285
    %v1671 = vpop.f32.mrf.mxu0
    %v1672 = vadd.f32 0.0, %v1671
    %v1673 = vpop.f32.mrf.mxu0
    %v1674 = vadd.f32 0.0, %v1673
    %1675 = vmatmul.bf16.gmra.mxu0 %v1288
    %v1676 = vpop.f32.mrf.mxu0
    %v1677 = vadd.f32 0.0, %v1676
    %v1678 = vpop.f32.mrf.mxu0
    %v1679 = vadd.f32 0.0, %v1678
    %1680 = vdwg.mxu0
    %1681 = vmatpush.bf16.msra.mxu0 %v1571
    %1682 = vmatpush.bf16.msra.mxu0 %v1567
    %1683 = vmatpush.bf16.msra.mxu0 %v1563
    %1684 = vmatpush.bf16.msra.mxu0 %v1559
    %1685 = vmatpush.bf16.msra.mxu0 %v1555
    %1686 = vmatpush.bf16.msra.mxu0 %v1551
    %1687 = vmatpush.bf16.msra.mxu0 %v1547
    %1688 = vmatpush.bf16.msra.mxu0 %v1543
    %1689 = vmatmul.bf16.gmra.mxu0 %v1286
    %v1690 = vpop.f32.mrf.mxu0
    %v1691 = vadd.f32 %v1672, %v1690
    %v1692 = vpop.f32.mrf.mxu0
    %v1693 = vadd.f32 %v1674, %v1692
    %1694 = vmatmul.bf16.gmra.mxu0 %v1289
    %v1695 = vpop.f32.mrf.mxu0
    %v1696 = vadd.f32 %v1677, %v1695
    %v1697 = vpop.f32.mrf.mxu0
    %v1698 = vadd.f32 %v1679, %v1697
    %1699 = vdwg.mxu0
    %1700 = vmatpush.bf16.msra.mxu0 0
    %1701 = vmatpush.bf16.msra.mxu0 0
    %1702 = vmatpush.bf16.msra.mxu0 0
    %1703 = vmatpush.bf16.msra.mxu0 0
    %1704 = vmatpush.bf16.msra.mxu0 0
    %1705 = vmatpush.bf16.msra.mxu0 0
    %1706 = vmatpush.bf16.msra.mxu0 %v1579
    %1707 = vmatpush.bf16.msra.mxu0 %v1575
    %1708 = vmatmul.bf16.gmra.mxu0 %v1657
    %v1709 = vpop.f32.mrf.mxu0
    %v1710 = vadd.f32 %v1691, %v1709
    %v1711 = vpop.f32.mrf.mxu0
    %v1712 = vadd.f32 %v1693, %v1711
    %1713 = vmatmul.bf16.gmra.mxu0 %v1660
    %v1714 = vpop.f32.mrf.mxu0
    %v1715 = vadd.f32 %v1696, %v1714
    %v1716 = vpop.f32.mrf.mxu0
    %v1717 = vadd.f32 %v1698, %v1716
    %1718 = vdwg.mxu0
    %1719 = vmatpush.bf16.msra.mxu0 %v1540
    %1720 = vmatpush.bf16.msra.mxu0 %v1536
    %1721 = vmatpush.bf16.msra.mxu0 %v1532
    %1722 = vmatpush.bf16.msra.mxu0 %v1528
    %1723 = vmatpush.bf16.msra.mxu0 %v1524
    %1724 = vmatpush.bf16.msra.mxu0 %v1520
    %1725 = vmatpush.bf16.msra.mxu0 %v1516
    %1726 = vmatpush.bf16.msra.mxu0 %v1512
    %1727 = vmatmul.bf16.gmra.mxu0 %v1285
    %v1728 = vpop.f32.mrf.mxu0
    %v1729 = vadd.f32 0.0, %v1728
    %v1730 = vpop.f32.mrf.mxu0
    %v1731 = vadd.f32 0.0, %v1730
    %1732 = vmatmul.bf16.gmra.mxu0 %v1288
    %v1733 = vpop.f32.mrf.mxu0
    %v1734 = vadd.f32 0.0, %v1733
    %v1735 = vpop.f32.mrf.mxu0
    %v1736 = vadd.f32 0.0, %v1735
    %1737 = vdwg.mxu0
    %1738 = vmatpush.bf16.msra.mxu0 %v1572
    %1739 = vmatpush.bf16.msra.mxu0 %v1568
    %1740 = vmatpush.bf16.msra.mxu0 %v1564
    %1741 = vmatpush.bf16.msra.mxu0 %v1560
    %1742 = vmatpush.bf16.msra.mxu0 %v1556
    %1743 = vmatpush.bf16.msra.mxu0 %v1552
    %1744 = vmatpush.bf16.msra.mxu0 %v1548
    %1745 = vmatpush.bf16.msra.mxu0 %v1544
    %1746 = vmatmul.bf16.gmra.mxu0 %v1286
    %v1747 = vpop.f32.mrf.mxu0
    %v1748 = vadd.f32 %v1729, %v1747
    %v1749 = vpop.f32.mrf.mxu0
    %v1750 = vadd.f32 %v1731, %v1749
    %1751 = vmatmul.bf16.gmra.mxu0 %v1289
    %v1752 = vpop.f32.mrf.mxu0
    %v1753 = vadd.f32 %v1734, %v1752
    %v1754 = vpop.f32.mrf.mxu0
    %v1755 = vadd.f32 %v1736, %v1754
    %1756 = vdwg.mxu0
    %1757 = vmatpush.bf16.msra.mxu0 0
    %1758 = vmatpush.bf16.msra.mxu0 0
    %1759 = vmatpush.bf16.msra.mxu0 0
    %1760 = vmatpush.bf16.msra.mxu0 0
    %1761 = vmatpush.bf16.msra.mxu0 0
    %1762 = vmatpush.bf16.msra.mxu0 0
    %1763 = vmatpush.bf16.msra.mxu0 %v1580
    %1764 = vmatpush.bf16.msra.mxu0 %v1576
    %1765 = vmatmul.bf16.gmra.mxu0 %v1657
    %v1766 = vpop.f32.mrf.mxu0
    %v1767 = vadd.f32 %v1748, %v1766
    %v1768 = vpop.f32.mrf.mxu0
    %v1769 = vadd.f32 %v1750, %v1768
    %1770 = vmatmul.bf16.gmra.mxu0 %v1660
    %v1771 = vpop.f32.mrf.mxu0
    %v1772 = vadd.f32 %v1753, %v1771
    %v1773 = vpop.f32.mrf.mxu0
    %v1774 = vadd.f32 %v1755, %v1773
    %1775 = vdwg.mxu0
    %1776 = vmatpush.bf16.msra.mxu0 %v1541
    %1777 = vmatpush.bf16.msra.mxu0 %v1537
    %1778 = vmatpush.bf16.msra.mxu0 %v1533
    %1779 = vmatpush.bf16.msra.mxu0 %v1529
    %1780 = vmatpush.bf16.msra.mxu0 %v1525
    %1781 = vmatpush.bf16.msra.mxu0 %v1521
    %1782 = vmatpush.bf16.msra.mxu0 %v1517
    %1783 = vmatpush.bf16.msra.mxu0 %v1513
    %1784 = vmatmul.bf16.gmra.mxu0 %v1285
    %v1785 = vpop.f32.mrf.mxu0
    %v1786 = vadd.f32 0.0, %v1785
    %v1787 = vpop.f32.mrf.mxu0
    %v1788 = vadd.f32 0.0, %v1787
    %1789 = vmatmul.bf16.gmra.mxu0 %v1288
    %v1790 = vpop.f32.mrf.mxu0
    %v1791 = vadd.f32 0.0, %v1790
    %v1792 = vpop.f32.mrf.mxu0
    %v1793 = vadd.f32 0.0, %v1792
    %1794 = vdwg.mxu0
    %1795 = vmatpush.bf16.msra.mxu0 %v1573
    %1796 = vmatpush.bf16.msra.mxu0 %v1569
    %1797 = vmatpush.bf16.msra.mxu0 %v1565
    %1798 = vmatpush.bf16.msra.mxu0 %v1561
    %1799 = vmatpush.bf16.msra.mxu0 %v1557
    %1800 = vmatpush.bf16.msra.mxu0 %v1553
    %1801 = vmatpush.bf16.msra.mxu0 %v1549
    %1802 = vmatpush.bf16.msra.mxu0 %v1545
    %1803 = vmatmul.bf16.gmra.mxu0 %v1286
    %v1804 = vpop.f32.mrf.mxu0
    %v1805 = vadd.f32 %v1786, %v1804
    %v1806 = vpop.f32.mrf.mxu0
    %v1807 = vadd.f32 %v1788, %v1806
    %1808 = vmatmul.bf16.gmra.mxu0 %v1289
    %v1809 = vpop.f32.mrf.mxu0
    %v1810 = vadd.f32 %v1791, %v1809
    %v1811 = vpop.f32.mrf.mxu0
    %v1812 = vadd.f32 %v1793, %v1811
    %1813 = vdwg.mxu0
    %1814 = vmatpush.bf16.msra.mxu0 0
    %1815 = vmatpush.bf16.msra.mxu0 0
    %1816 = vmatpush.bf16.msra.mxu0 0
    %1817 = vmatpush.bf16.msra.mxu0 0
    %1818 = vmatpush.bf16.msra.mxu0 0
    %1819 = vmatpush.bf16.msra.mxu0 0
    %1820 = vmatpush.bf16.msra.mxu0 %v1581
    %1821 = vmatpush.bf16.msra.mxu0 %v1577
    %1822 = vmatmul.bf16.gmra.mxu0 %v1657
    %v1823 = vpop.f32.mrf.mxu0
    %v1824 = vadd.f32 %v1805, %v1823
    %v1825 = vpop.f32.mrf.mxu0
    %v1826 = vadd.f32 %v1807, %v1825
    %1827 = vmatmul.bf16.gmra.mxu0 %v1660
    %v1828 = vpop.f32.mrf.mxu0
    %v1829 = vadd.f32 %v1810, %v1828
    %v1830 = vpop.f32.mrf.mxu0
    %v1831 = vadd.f32 %v1812, %v1830
    %1832 = vdwg.mxu0
    %1833 = vmatpush.bf16.msra.mxu0 %v1542
    %1834 = vmatpush.bf16.msra.mxu0 %v1538
    %1835 = vmatpush.bf16.msra.mxu0 %v1534
    %1836 = vmatpush.bf16.msra.mxu0 %v1530
    %1837 = vmatpush.bf16.msra.mxu0 %v1526
    %1838 = vmatpush.bf16.msra.mxu0 %v1522
    %1839 = vmatpush.bf16.msra.mxu0 %v1518
    %1840 = vmatpush.bf16.msra.mxu0 %v1514
    %1841 = vmatmul.bf16.gmra.mxu0 %v1285
    %v1842 = vpop.f32.mrf.mxu0
    %v1843 = vadd.f32 0.0, %v1842
    %v1844 = vpop.f32.mrf.mxu0
    %v1845 = vadd.f32 0.0, %v1844
    %1846 = vmatmul.bf16.gmra.mxu0 %v1288
    %v1847 = vpop.f32.mrf.mxu0
    %v1848 = vadd.f32 0.0, %v1847
    %v1849 = vpop.f32.mrf.mxu0
    %v1850 = vadd.f32 0.0, %v1849
    %1851 = vdwg.mxu0
    %1852 = vmatpush.bf16.msra.mxu0 %v1574
    %1853 = vmatpush.bf16.msra.mxu0 %v1570
    %1854 = vmatpush.bf16.msra.mxu0 %v1566
    %1855 = vmatpush.bf16.msra.mxu0 %v1562
    %1856 = vmatpush.bf16.msra.mxu0 %v1558
    %1857 = vmatpush.bf16.msra.mxu0 %v1554
    %1858 = vmatpush.bf16.msra.mxu0 %v1550
    %1859 = vmatpush.bf16.msra.mxu0 %v1546
    %1860 = vmatmul.bf16.gmra.mxu0 %v1286
    %v1861 = vpop.f32.mrf.mxu0
    %v1862 = vadd.f32 %v1843, %v1861
    %v1863 = vpop.f32.mrf.mxu0
    %v1864 = vadd.f32 %v1845, %v1863
    %1865 = vmatmul.bf16.gmra.mxu0 %v1289
    %v1866 = vpop.f32.mrf.mxu0
    %v1867 = vadd.f32 %v1848, %v1866
    %v1868 = vpop.f32.mrf.mxu0
    %v1869 = vadd.f32 %v1850, %v1868
    %1870 = vdwg.mxu0
    %1871 = vmatpush.bf16.msra.mxu0 0
    %1872 = vmatpush.bf16.msra.mxu0 0
    %1873 = vmatpush.bf16.msra.mxu0 0
    %1874 = vmatpush.bf16.msra.mxu0 0
    %1875 = vmatpush.bf16.msra.mxu0 0
    %1876 = vmatpush.bf16.msra.mxu0 0
    %1877 = vmatpush.bf16.msra.mxu0 %v1582
    %1878 = vmatpush.bf16.msra.mxu0 %v1578
    %1879 = vmatmul.bf16.gmra.mxu0 %v1657
    %v1880 = vpop.f32.mrf.mxu0
    %v1881 = vadd.f32 %v1862, %v1880
    %v1882 = vpop.f32.mrf.mxu0
    %v1883 = vadd.f32 %v1864, %v1882
    %1884 = vmatmul.bf16.gmra.mxu0 %v1660
    %v1885 = vpop.f32.mrf.mxu0
    %v1886 = vadd.f32 %v1867, %v1885
    %v1887 = vpop.f32.mrf.mxu0
    %v1888 = vadd.f32 %v1869, %v1887
    %1889 = vdwg.mxu0
    %v1890 = vld [vmem:[%s5] sm:$0xff]
    %v1891 = vld [vmem:[%s5 + $0x8] sm:$0xff]
    %v1892 = vld [vmem:[%s5 + $0x10] sm:$0xff]
    %v1893 = vld [vmem:[%s5 + $0x18] sm:$0xff]
    %v1894 = vld [vmem:[%s6] sm:$0xff]
    %v1895 = vld [vmem:[%s6 + $0x8] sm:$0xff]
    %v1896 = vld [vmem:[%s6 + $0x10] sm:$0xff]
    %v1897 = vld [vmem:[%s6 + $0x18] sm:$0xff]
    %v1898 = vadd.f32 %v1710, %v1767
    %v1899 = vadd.f32 %v1898, %v1824
    %v1900 = vadd.f32 %v1899, %v1881
    %1901 = vadd.xlane.f32.xlu0 %v1900
    %v1902 = vpop.xlane.xlu0 %1901
    %v1903 = vadd.f32 %v1712, %v1769
    %v1904 = vadd.f32 %v1903, %v1826
    %v1905 = vadd.f32 %v1904, %v1883
    %1906 = vadd.xlane.f32.xlu0 %v1905
    %v1907 = vpop.xlane.xlu0 %1906
    %v1908 = vadd.f32 %v1715, %v1772
    %v1909 = vadd.f32 %v1908, %v1829
    %v1910 = vadd.f32 %v1909, %v1886
    %1911 = vadd.xlane.f32.xlu0 %v1910
    %v1912 = vpop.xlane.xlu0 %1911
    %v1913 = vadd.f32 %v1717, %v1774
    %v1914 = vadd.f32 %v1913, %v1831
    %v1915 = vadd.f32 %v1914, %v1888
    %1916 = vadd.xlane.f32.xlu0 %v1915
    %v1917 = vpop.xlane.xlu0 %1916
    %v1918 = vmul.f32 %v1902, %v235
    %v1919 = vmul.f32 %v1907, %v235
    %v1920 = vmul.f32 %v1912, %v235
    %v1921 = vmul.f32 %v1917, %v235
    %v1922 = vmul.f32 %v1710, %v1710
    %v1923 = vmul.f32 %v1767, %v1767
    %v1924 = vmul.f32 %v1824, %v1824
    %v1925 = vmul.f32 %v1881, %v1881
    %v1926 = vmul.f32 %v1712, %v1712
    %v1927 = vmul.f32 %v1769, %v1769
    %v1928 = vmul.f32 %v1826, %v1826
    %v1929 = vmul.f32 %v1883, %v1883
    %v1930 = vmul.f32 %v1715, %v1715
    %v1931 = vmul.f32 %v1772, %v1772
    %v1932 = vmul.f32 %v1829, %v1829
    %v1933 = vmul.f32 %v1886, %v1886
    %v1934 = vmul.f32 %v1717, %v1717
    %v1935 = vmul.f32 %v1774, %v1774
    %v1936 = vmul.f32 %v1831, %v1831
    %v1937 = vmul.f32 %v1888, %v1888
    %v1938 = vadd.f32 %v1922, %v1923
    %v1939 = vadd.f32 %v1938, %v1924
    %v1940 = vadd.f32 %v1939, %v1925
    %1941 = vadd.xlane.f32.xlu0 %v1940
    %v1942 = vpop.xlane.xlu0 %1941
    %v1943 = vadd.f32 %v1926, %v1927
    %v1944 = vadd.f32 %v1943, %v1928
    %v1945 = vadd.f32 %v1944, %v1929
    %1946 = vadd.xlane.f32.xlu0 %v1945
    %v1947 = vpop.xlane.xlu0 %1946
    %v1948 = vadd.f32 %v1930, %v1931
    %v1949 = vadd.f32 %v1948, %v1932
    %v1950 = vadd.f32 %v1949, %v1933
    %1951 = vadd.xlane.f32.xlu0 %v1950
    %v1952 = vpop.xlane.xlu0 %1951
    %v1953 = vadd.f32 %v1934, %v1935
    %v1954 = vadd.f32 %v1953, %v1936
    %v1955 = vadd.f32 %v1954, %v1937
    %1956 = vadd.xlane.f32.xlu0 %v1955
    %v1957 = vpop.xlane.xlu0 %1956
    %v1958 = vmul.f32 %v1942, %v235
    %v1959 = vmul.f32 %v1947, %v235
    %v1960 = vmul.f32 %v1952, %v235
    %v1961 = vmul.f32 %v1957, %v235
    %v1962 = vmul.f32 %v1918, %v1918
    %v1963 = vmul.f32 %v1919, %v1919
    %v1964 = vmul.f32 %v1920, %v1920
    %v1965 = vmul.f32 %v1921, %v1921
    %v1966 = vsub.f32 %v1958, %v1962
    %v1967 = vsub.f32 %v1959, %v1963
    %v1968 = vsub.f32 %v1960, %v1964
    %v1969 = vsub.f32 %v1961, %v1965
    %v1970 = vadd.f32 %v1966, 1e-05
    %v1971 = vadd.f32 %v1967, 1e-05
    %v1972 = vadd.f32 %v1968, 1e-05
    %v1973 = vadd.f32 %v1969, 1e-05
    %v1974 = vrsqrt.pop %v1970
    %v1975 = vmul.f32 %v1974, %v1970
    %v1976 = vmul.f32 %v1975, %v1974
    %v1977 = vmul.f32 0.5, %v1976
    %v1978 = vsub.f32 1.5, %v1977
    %v1979 = vmul.f32 %v1974, %v1978
    %vm1980 = vweird.f32 %v1970
    %vm1981 = vweird.f32 %v1974
    %vm1982 = vmor %vm1980, %vm1981
    %v1983 = vsel %vm1982, %v1974, %v1979
    %v1984 = vrsqrt.pop %v1971
    %v1985 = vmul.f32 %v1984, %v1971
    %v1986 = vmul.f32 %v1985, %v1984
    %v1987 = vmul.f32 0.5, %v1986
    %v1988 = vsub.f32 1.5, %v1987
    %v1989 = vmul.f32 %v1984, %v1988
    %vm1990 = vweird.f32 %v1971
    %vm1991 = vweird.f32 %v1984
    %vm1992 = vmor %vm1990, %vm1991
    %v1993 = vsel %vm1992, %v1984, %v1989
    %v1994 = vrsqrt.pop %v1972
    %v1995 = vmul.f32 %v1994, %v1972
    %v1996 = vmul.f32 %v1995, %v1994
    %v1997 = vmul.f32 0.5, %v1996
    %v1998 = vsub.f32 1.5, %v1997
    %v1999 = vmul.f32 %v1994, %v1998
    %vm2000 = vweird.f32 %v1972
    %vm2001 = vweird.f32 %v1994
    %vm2002 = vmor %vm2000, %vm2001
    %v2003 = vsel %vm2002, %v1994, %v1999
    %v2004 = vrsqrt.pop %v1973
    %v2005 = vmul.f32 %v2004, %v1973
    %v2006 = vmul.f32 %v2005, %v2004
    %v2007 = vmul.f32 0.5, %v2006
    %v2008 = vsub.f32 1.5, %v2007
    %v2009 = vmul.f32 %v2004, %v2008
    %vm2010 = vweird.f32 %v1973
    %vm2011 = vweird.f32 %v2004
    %vm2012 = vmor %vm2010, %vm2011
    %v2013 = vsel %vm2012, %v2004, %v2009
    %v2014 = vmul.f32 %v1890, %v1983
    %v2015 = vmul.f32 %v1891, %v1993
    %v2016 = vmul.f32 %v1892, %v2003
    %v2017 = vmul.f32 %v1893, %v2013
    %v2018 = vmul.f32 %v1918, %v2014
    %v2019 = vmul.f32 %v1919, %v2015
    %v2020 = vmul.f32 %v1920, %v2016
    %v2021 = vmul.f32 %v1921, %v2017
    %v2022 = vsub.f32 %v1894, %v2018
    %v2023 = vsub.f32 %v1895, %v2019
    %v2024 = vsub.f32 %v1896, %v2020
    %v2025 = vsub.f32 %v1897, %v2021
    %2027 = vset.pattern.permute.xlu0 0
    %2028 = vperm.xlu0 %2027, %v2014
    %v2029 = vpop.permute.xlu0 %2028
    %2032 = vset.pattern.permute.xlu0 0
    %2033 = vperm.xlu0 %2032, %v2015
    %v2034 = vpop.permute.xlu0 %2033
    %2037 = vset.pattern.permute.xlu0 0
    %2038 = vperm.xlu0 %2037, %v2016
    %v2039 = vpop.permute.xlu0 %2038
    %2042 = vset.pattern.permute.xlu0 0
    %2043 = vperm.xlu0 %2042, %v2017
    %v2044 = vpop.permute.xlu0 %2043
    %v2046 = vmul.f32 %v1710, %v2029
    %v2047 = vmul.f32 %v1767, %v2029
    %v2048 = vmul.f32 %v1824, %v2029
    %v2049 = vmul.f32 %v1881, %v2029
    %v2050 = vmul.f32 %v1712, %v2034
    %v2051 = vmul.f32 %v1769, %v2034
    %v2052 = vmul.f32 %v1826, %v2034
    %v2053 = vmul.f32 %v1883, %v2034
    %v2054 = vmul.f32 %v1715, %v2039
    %v2055 = vmul.f32 %v1772, %v2039
    %v2056 = vmul.f32 %v1829, %v2039
    %v2057 = vmul.f32 %v1886, %v2039
    %v2058 = vmul.f32 %v1717, %v2044
    %v2059 = vmul.f32 %v1774, %v2044
    %v2060 = vmul.f32 %v1831, %v2044
    %v2061 = vmul.f32 %v1888, %v2044
    %2063 = vset.pattern.permute.xlu0 0
    %2064 = vperm.xlu0 %2063, %v2022
    %v2065 = vpop.permute.xlu0 %2064
    %2068 = vset.pattern.permute.xlu0 0
    %2069 = vperm.xlu0 %2068, %v2023
    %v2070 = vpop.permute.xlu0 %2069
    %2073 = vset.pattern.permute.xlu0 0
    %2074 = vperm.xlu0 %2073, %v2024
    %v2075 = vpop.permute.xlu0 %2074
    %2078 = vset.pattern.permute.xlu0 0
    %2079 = vperm.xlu0 %2078, %v2025
    %v2080 = vpop.permute.xlu0 %2079
    %v2082 = vadd.f32 %v2046, %v2065
    %v2083 = vadd.f32 %v2047, %v2065
    %v2084 = vadd.f32 %v2048, %v2065
    %v2085 = vadd.f32 %v2049, %v2065
    %v2086 = vadd.f32 %v2050, %v2070
    %v2087 = vadd.f32 %v2051, %v2070
    %v2088 = vadd.f32 %v2052, %v2070
    %v2089 = vadd.f32 %v2053, %v2070
    %v2090 = vadd.f32 %v2054, %v2075
    %v2091 = vadd.f32 %v2055, %v2075
    %v2092 = vadd.f32 %v2056, %v2075
    %v2093 = vadd.f32 %v2057, %v2075
    %v2094 = vadd.f32 %v2058, %v2080
    %v2095 = vadd.f32 %v2059, %v2080
    %v2096 = vadd.f32 %v2060, %v2080
    %v2097 = vadd.f32 %v2061, %v2080
    %v2098 = vmax.f32 %v2082, 0.0
    %v2099 = vmax.f32 %v2083, 0.0
    %v2100 = vmax.f32 %v2084, 0.0
    %v2101 = vmax.f32 %v2085, 0.0
    %v2102 = vmax.f32 %v2086, 0.0
    %v2103 = vmax.f32 %v2087, 0.0
    %v2104 = vmax.f32 %v2088, 0.0
    %v2105 = vmax.f32 %v2089, 0.0
    %v2106 = vmax.f32 %v2090, 0.0
    %v2107 = vmax.f32 %v2091, 0.0
    %v2108 = vmax.f32 %v2092, 0.0
    %v2109 = vmax.f32 %v2093, 0.0
    %v2110 = vmax.f32 %v2094, 0.0
    %v2111 = vmax.f32 %v2095, 0.0
    %v2112 = vmax.f32 %v2096, 0.0
    %v2113 = vmax.f32 %v2097, 0.0
    %v2114 = vld [vmem:[%s7] sm:$0xf]
    %v2115 = vld [vmem:[%s7 + $0x4] sm:$0xf]
    %v2116 = vld [vmem:[%s7 + $0x8] sm:$0xf]
    %v2117 = vld [vmem:[%s7 + $0xc] sm:$0xf]
    %v2118 = vld [vmem:[%s7 + $0x10] sm:$0xf]
    %v2119 = vld [vmem:[%s7 + $0x14] sm:$0xf]
    %v2120 = vld [vmem:[%s7 + $0x18] sm:$0xf]
    %v2121 = vld [vmem:[%s7 + $0x1c] sm:$0xf]
    %v2122 = vpack.c.bf16 %v2102, %v2098
    %v2123 = vpack.c.bf16 %v2103, %v2099
    %v2124 = vpack.c.bf16 %v2104, %v2100
    %v2125 = vpack.c.bf16 %v2105, %v2101
    %v2126 = vpack.c.bf16 %v2110, %v2106
    %v2127 = vpack.c.bf16 %v2111, %v2107
    %v2128 = vpack.c.bf16 %v2112, %v2108
    %v2129 = vpack.c.bf16 %v2113, %v2109
    %v2138 = vunpack.c.l.b16 %v2114
    %v2139 = vunpack.c.l.b16 %v2115
    %v2140 = vunpack.c.l.b16 %v2116
    %v2141 = vunpack.c.l.b16 %v2117
    %v2142 = vunpack.c.l.b16 %v2118
    %v2143 = vunpack.c.l.b16 %v2119
    %v2144 = vunpack.c.l.b16 %v2120
    %v2145 = vunpack.c.l.b16 %v2121
    %v2146 = vpack.c.b16 %v2139, %v2138
    %v2147 = vpack.c.b16 %v2141, %v2140
    %v2148 = vpack.c.b16 %v2143, %v2142
    %v2149 = vpack.c.b16 %v2145, %v2144
    %v2151 = vsel %vm1655, %v2146, 0
    %v2154 = vsel %vm1655, %v2147, 0
    %v2157 = vsel %vm1655, %v2148, 0
    %v2160 = vsel %vm1655, %v2149, 0
    %2162 = vmatpush.bf16.msra.mxu0 0
    %2163 = vmatpush.bf16.msra.mxu0 0
    %2164 = vmatpush.bf16.msra.mxu0 0
    %2165 = vmatpush.bf16.msra.mxu0 0
    %2166 = vmatpush.bf16.msra.mxu0 0
    %2167 = vmatpush.bf16.msra.mxu0 0
    %2168 = vmatpush.bf16.msra.mxu0 %v2126
    %2169 = vmatpush.bf16.msra.mxu0 %v2122
    %2170 = vmatmul.bf16.gmra.mxu0 %v2151
    %v2171 = vpop.f32.mrf.mxu0
    %v2172 = vadd.f32 0.0, %v2171
    %v2173 = vpop.f32.mrf.mxu0
    %v2174 = vadd.f32 0.0, %v2173
    %2175 = vmatmul.bf16.gmra.mxu0 %v2154
    %v2176 = vpop.f32.mrf.mxu0
    %v2177 = vadd.f32 0.0, %v2176
    %v2178 = vpop.f32.mrf.mxu0
    %v2179 = vadd.f32 0.0, %v2178
    %2180 = vmatmul.bf16.gmra.mxu0 %v2157
    %v2181 = vpop.f32.mrf.mxu0
    %v2182 = vadd.f32 0.0, %v2181
    %v2183 = vpop.f32.mrf.mxu0
    %v2184 = vadd.f32 0.0, %v2183
    %2185 = vmatmul.bf16.gmra.mxu0 %v2160
    %v2186 = vpop.f32.mrf.mxu0
    %v2187 = vadd.f32 0.0, %v2186
    %v2188 = vpop.f32.mrf.mxu0
    %v2189 = vadd.f32 0.0, %v2188
    %2190 = vdwg.mxu0
    %2191 = vmatpush.bf16.msra.mxu0 0
    %2192 = vmatpush.bf16.msra.mxu0 0
    %2193 = vmatpush.bf16.msra.mxu0 0
    %2194 = vmatpush.bf16.msra.mxu0 0
    %2195 = vmatpush.bf16.msra.mxu0 0
    %2196 = vmatpush.bf16.msra.mxu0 0
    %2197 = vmatpush.bf16.msra.mxu0 %v2127
    %2198 = vmatpush.bf16.msra.mxu0 %v2123
    %2199 = vmatmul.bf16.gmra.mxu0 %v2151
    %v2200 = vpop.f32.mrf.mxu0
    %v2201 = vadd.f32 0.0, %v2200
    %v2202 = vpop.f32.mrf.mxu0
    %v2203 = vadd.f32 0.0, %v2202
    %2204 = vmatmul.bf16.gmra.mxu0 %v2154
    %v2205 = vpop.f32.mrf.mxu0
    %v2206 = vadd.f32 0.0, %v2205
    %v2207 = vpop.f32.mrf.mxu0
    %v2208 = vadd.f32 0.0, %v2207
    %2209 = vmatmul.bf16.gmra.mxu0 %v2157
    %v2210 = vpop.f32.mrf.mxu0
    %v2211 = vadd.f32 0.0, %v2210
    %v2212 = vpop.f32.mrf.mxu0
    %v2213 = vadd.f32 0.0, %v2212
    %2214 = vmatmul.bf16.gmra.mxu0 %v2160
    %v2215 = vpop.f32.mrf.mxu0
    %v2216 = vadd.f32 0.0, %v2215
    %v2217 = vpop.f32.mrf.mxu0
    %v2218 = vadd.f32 0.0, %v2217
    %2219 = vdwg.mxu0
    %2220 = vmatpush.bf16.msra.mxu0 0
    %2221 = vmatpush.bf16.msra.mxu0 0
    %2222 = vmatpush.bf16.msra.mxu0 0
    %2223 = vmatpush.bf16.msra.mxu0 0
    %2224 = vmatpush.bf16.msra.mxu0 0
    %2225 = vmatpush.bf16.msra.mxu0 0
    %2226 = vmatpush.bf16.msra.mxu0 %v2128
    %2227 = vmatpush.bf16.msra.mxu0 %v2124
    %2228 = vmatmul.bf16.gmra.mxu0 %v2151
    %v2229 = vpop.f32.mrf.mxu0
    %v2230 = vadd.f32 0.0, %v2229
    %v2231 = vpop.f32.mrf.mxu0
    %v2232 = vadd.f32 0.0, %v2231
    %2233 = vmatmul.bf16.gmra.mxu0 %v2154
    %v2234 = vpop.f32.mrf.mxu0
    %v2235 = vadd.f32 0.0, %v2234
    %v2236 = vpop.f32.mrf.mxu0
    %v2237 = vadd.f32 0.0, %v2236
    %2238 = vmatmul.bf16.gmra.mxu0 %v2157
    %v2239 = vpop.f32.mrf.mxu0
    %v2240 = vadd.f32 0.0, %v2239
    %v2241 = vpop.f32.mrf.mxu0
    %v2242 = vadd.f32 0.0, %v2241
    %2243 = vmatmul.bf16.gmra.mxu0 %v2160
    %v2244 = vpop.f32.mrf.mxu0
    %v2245 = vadd.f32 0.0, %v2244
    %v2246 = vpop.f32.mrf.mxu0
    %v2247 = vadd.f32 0.0, %v2246
    %2248 = vdwg.mxu0
    %2249 = vmatpush.bf16.msra.mxu0 0
    %2250 = vmatpush.bf16.msra.mxu0 0
    %2251 = vmatpush.bf16.msra.mxu0 0
    %2252 = vmatpush.bf16.msra.mxu0 0
    %2253 = vmatpush.bf16.msra.mxu0 0
    %2254 = vmatpush.bf16.msra.mxu0 0
    %2255 = vmatpush.bf16.msra.mxu0 %v2129
    %2256 = vmatpush.bf16.msra.mxu0 %v2125
    %2257 = vmatmul.bf16.gmra.mxu0 %v2151
    %v2258 = vpop.f32.mrf.mxu0
    %v2259 = vadd.f32 0.0, %v2258
    %v2260 = vpop.f32.mrf.mxu0
    %v2261 = vadd.f32 0.0, %v2260
    %2262 = vmatmul.bf16.gmra.mxu0 %v2154
    %v2263 = vpop.f32.mrf.mxu0
    %v2264 = vadd.f32 0.0, %v2263
    %v2265 = vpop.f32.mrf.mxu0
    %v2266 = vadd.f32 0.0, %v2265
    %2267 = vmatmul.bf16.gmra.mxu0 %v2157
    %v2268 = vpop.f32.mrf.mxu0
    %v2269 = vadd.f32 0.0, %v2268
    %v2270 = vpop.f32.mrf.mxu0
    %v2271 = vadd.f32 0.0, %v2270
    %2272 = vmatmul.bf16.gmra.mxu0 %v2160
    %v2273 = vpop.f32.mrf.mxu0
    %v2274 = vadd.f32 0.0, %v2273
    %v2275 = vpop.f32.mrf.mxu0
    %v2276 = vadd.f32 0.0, %v2275
    %2277 = vdwg.mxu0
    %v2278 = vld [vmem:[%s8] sm:$0xff]
    %v2279 = vld [vmem:[%s8 + $0x8] sm:$0xff]
    %v2280 = vld [vmem:[%s8 + $0x10] sm:$0xff]
    %v2281 = vld [vmem:[%s8 + $0x18] sm:$0xff]
    %v2282 = vld [vmem:[%s8 + $0x20] sm:$0xff]
    %v2283 = vld [vmem:[%s8 + $0x28] sm:$0xff]
    %v2284 = vld [vmem:[%s8 + $0x30] sm:$0xff]
    %v2285 = vld [vmem:[%s8 + $0x38] sm:$0xff]
    %v2286 = vld [vmem:[%s9] sm:$0xff]
    %v2287 = vld [vmem:[%s9 + $0x8] sm:$0xff]
    %v2288 = vld [vmem:[%s9 + $0x10] sm:$0xff]
    %v2289 = vld [vmem:[%s9 + $0x18] sm:$0xff]
    %v2290 = vld [vmem:[%s9 + $0x20] sm:$0xff]
    %v2291 = vld [vmem:[%s9 + $0x28] sm:$0xff]
    %v2292 = vld [vmem:[%s9 + $0x30] sm:$0xff]
    %v2293 = vld [vmem:[%s9 + $0x38] sm:$0xff]
    %v2294 = vadd.f32 %v2172, %v2201
    %v2295 = vadd.f32 %v2294, %v2230
    %v2296 = vadd.f32 %v2295, %v2259
    %2297 = vadd.xlane.f32.xlu0 %v2296
    %v2298 = vpop.xlane.xlu0 %2297
    %v2299 = vadd.f32 %v2174, %v2203
    %v2300 = vadd.f32 %v2299, %v2232
    %v2301 = vadd.f32 %v2300, %v2261
    %2302 = vadd.xlane.f32.xlu0 %v2301
    %v2303 = vpop.xlane.xlu0 %2302
    %v2304 = vadd.f32 %v2177, %v2206
    %v2305 = vadd.f32 %v2304, %v2235
    %v2306 = vadd.f32 %v2305, %v2264
    %2307 = vadd.xlane.f32.xlu0 %v2306
    %v2308 = vpop.xlane.xlu0 %2307
    %v2309 = vadd.f32 %v2179, %v2208
    %v2310 = vadd.f32 %v2309, %v2237
    %v2311 = vadd.f32 %v2310, %v2266
    %2312 = vadd.xlane.f32.xlu0 %v2311
    %v2313 = vpop.xlane.xlu0 %2312
    %v2314 = vadd.f32 %v2182, %v2211
    %v2315 = vadd.f32 %v2314, %v2240
    %v2316 = vadd.f32 %v2315, %v2269
    %2317 = vadd.xlane.f32.xlu0 %v2316
    %v2318 = vpop.xlane.xlu0 %2317
    %v2319 = vadd.f32 %v2184, %v2213
    %v2320 = vadd.f32 %v2319, %v2242
    %v2321 = vadd.f32 %v2320, %v2271
    %2322 = vadd.xlane.f32.xlu0 %v2321
    %v2323 = vpop.xlane.xlu0 %2322
    %v2324 = vadd.f32 %v2187, %v2216
    %v2325 = vadd.f32 %v2324, %v2245
    %v2326 = vadd.f32 %v2325, %v2274
    %2327 = vadd.xlane.f32.xlu0 %v2326
    %v2328 = vpop.xlane.xlu0 %2327
    %v2329 = vadd.f32 %v2189, %v2218
    %v2330 = vadd.f32 %v2329, %v2247
    %v2331 = vadd.f32 %v2330, %v2276
    %2332 = vadd.xlane.f32.xlu0 %v2331
    %v2333 = vpop.xlane.xlu0 %2332
    %v2334 = vmul.f32 %v2298, %v235
    %v2335 = vmul.f32 %v2303, %v235
    %v2336 = vmul.f32 %v2308, %v235
    %v2337 = vmul.f32 %v2313, %v235
    %v2338 = vmul.f32 %v2318, %v235
    %v2339 = vmul.f32 %v2323, %v235
    %v2340 = vmul.f32 %v2328, %v235
    %v2341 = vmul.f32 %v2333, %v235
    %v2342 = vmul.f32 %v2172, %v2172
    %v2343 = vmul.f32 %v2201, %v2201
    %v2344 = vmul.f32 %v2230, %v2230
    %v2345 = vmul.f32 %v2259, %v2259
    %v2346 = vmul.f32 %v2174, %v2174
    %v2347 = vmul.f32 %v2203, %v2203
    %v2348 = vmul.f32 %v2232, %v2232
    %v2349 = vmul.f32 %v2261, %v2261
    %v2350 = vmul.f32 %v2177, %v2177
    %v2351 = vmul.f32 %v2206, %v2206
    %v2352 = vmul.f32 %v2235, %v2235
    %v2353 = vmul.f32 %v2264, %v2264
    %v2354 = vmul.f32 %v2179, %v2179
    %v2355 = vmul.f32 %v2208, %v2208
    %v2356 = vmul.f32 %v2237, %v2237
    %v2357 = vmul.f32 %v2266, %v2266
    %v2358 = vmul.f32 %v2182, %v2182
    %v2359 = vmul.f32 %v2211, %v2211
    %v2360 = vmul.f32 %v2240, %v2240
    %v2361 = vmul.f32 %v2269, %v2269
    %v2362 = vmul.f32 %v2184, %v2184
    %v2363 = vmul.f32 %v2213, %v2213
    %v2364 = vmul.f32 %v2242, %v2242
    %v2365 = vmul.f32 %v2271, %v2271
    %v2366 = vmul.f32 %v2187, %v2187
    %v2367 = vmul.f32 %v2216, %v2216
    %v2368 = vmul.f32 %v2245, %v2245
    %v2369 = vmul.f32 %v2274, %v2274
    %v2370 = vmul.f32 %v2189, %v2189
    %v2371 = vmul.f32 %v2218, %v2218
    %v2372 = vmul.f32 %v2247, %v2247
    %v2373 = vmul.f32 %v2276, %v2276
    %v2374 = vadd.f32 %v2342, %v2343
    %v2375 = vadd.f32 %v2374, %v2344
    %v2376 = vadd.f32 %v2375, %v2345
    %2377 = vadd.xlane.f32.xlu0 %v2376
    %v2378 = vpop.xlane.xlu0 %2377
    %v2379 = vadd.f32 %v2346, %v2347
    %v2380 = vadd.f32 %v2379, %v2348
    %v2381 = vadd.f32 %v2380, %v2349
    %2382 = vadd.xlane.f32.xlu0 %v2381
    %v2383 = vpop.xlane.xlu0 %2382
    %v2384 = vadd.f32 %v2350, %v2351
    %v2385 = vadd.f32 %v2384, %v2352
    %v2386 = vadd.f32 %v2385, %v2353
    %2387 = vadd.xlane.f32.xlu0 %v2386
    %v2388 = vpop.xlane.xlu0 %2387
    %v2389 = vadd.f32 %v2354, %v2355
    %v2390 = vadd.f32 %v2389, %v2356
    %v2391 = vadd.f32 %v2390, %v2357
    %2392 = vadd.xlane.f32.xlu0 %v2391
    %v2393 = vpop.xlane.xlu0 %2392
    %v2394 = vadd.f32 %v2358, %v2359
    %v2395 = vadd.f32 %v2394, %v2360
    %v2396 = vadd.f32 %v2395, %v2361
    %2397 = vadd.xlane.f32.xlu0 %v2396
    %v2398 = vpop.xlane.xlu0 %2397
    %v2399 = vadd.f32 %v2362, %v2363
    %v2400 = vadd.f32 %v2399, %v2364
    %v2401 = vadd.f32 %v2400, %v2365
    %2402 = vadd.xlane.f32.xlu0 %v2401
    %v2403 = vpop.xlane.xlu0 %2402
    %v2404 = vadd.f32 %v2366, %v2367
    %v2405 = vadd.f32 %v2404, %v2368
    %v2406 = vadd.f32 %v2405, %v2369
    %2407 = vadd.xlane.f32.xlu0 %v2406
    %v2408 = vpop.xlane.xlu0 %2407
    %v2409 = vadd.f32 %v2370, %v2371
    %v2410 = vadd.f32 %v2409, %v2372
    %v2411 = vadd.f32 %v2410, %v2373
    %2412 = vadd.xlane.f32.xlu0 %v2411
    %v2413 = vpop.xlane.xlu0 %2412
    %v2414 = vmul.f32 %v2378, %v235
    %v2415 = vmul.f32 %v2383, %v235
    %v2416 = vmul.f32 %v2388, %v235
    %v2417 = vmul.f32 %v2393, %v235
    %v2418 = vmul.f32 %v2398, %v235
    %v2419 = vmul.f32 %v2403, %v235
    %v2420 = vmul.f32 %v2408, %v235
    %v2421 = vmul.f32 %v2413, %v235
    %v2422 = vmul.f32 %v2334, %v2334
    %v2423 = vmul.f32 %v2335, %v2335
    %v2424 = vmul.f32 %v2336, %v2336
    %v2425 = vmul.f32 %v2337, %v2337
    %v2426 = vmul.f32 %v2338, %v2338
    %v2427 = vmul.f32 %v2339, %v2339
    %v2428 = vmul.f32 %v2340, %v2340
    %v2429 = vmul.f32 %v2341, %v2341
    %v2430 = vsub.f32 %v2414, %v2422
    %v2431 = vsub.f32 %v2415, %v2423
    %v2432 = vsub.f32 %v2416, %v2424
    %v2433 = vsub.f32 %v2417, %v2425
    %v2434 = vsub.f32 %v2418, %v2426
    %v2435 = vsub.f32 %v2419, %v2427
    %v2436 = vsub.f32 %v2420, %v2428
    %v2437 = vsub.f32 %v2421, %v2429
    %v2438 = vadd.f32 %v2430, 1e-05
    %v2439 = vadd.f32 %v2431, 1e-05
    %v2440 = vadd.f32 %v2432, 1e-05
    %v2441 = vadd.f32 %v2433, 1e-05
    %v2442 = vadd.f32 %v2434, 1e-05
    %v2443 = vadd.f32 %v2435, 1e-05
    %v2444 = vadd.f32 %v2436, 1e-05
    %v2445 = vadd.f32 %v2437, 1e-05
    %v2446 = vrsqrt.pop %v2438
    %v2447 = vmul.f32 %v2446, %v2438
    %v2448 = vmul.f32 %v2447, %v2446
    %v2449 = vmul.f32 0.5, %v2448
    %v2450 = vsub.f32 1.5, %v2449
    %v2451 = vmul.f32 %v2446, %v2450
    %vm2452 = vweird.f32 %v2438
    %vm2453 = vweird.f32 %v2446
    %vm2454 = vmor %vm2452, %vm2453
    %v2455 = vsel %vm2454, %v2446, %v2451
    %v2456 = vrsqrt.pop %v2439
    %v2457 = vmul.f32 %v2456, %v2439
    %v2458 = vmul.f32 %v2457, %v2456
    %v2459 = vmul.f32 0.5, %v2458
    %v2460 = vsub.f32 1.5, %v2459
    %v2461 = vmul.f32 %v2456, %v2460
    %vm2462 = vweird.f32 %v2439
    %vm2463 = vweird.f32 %v2456
    %vm2464 = vmor %vm2462, %vm2463
    %v2465 = vsel %vm2464, %v2456, %v2461
    %v2466 = vrsqrt.pop %v2440
    %v2467 = vmul.f32 %v2466, %v2440
    %v2468 = vmul.f32 %v2467, %v2466
    %v2469 = vmul.f32 0.5, %v2468
    %v2470 = vsub.f32 1.5, %v2469
    %v2471 = vmul.f32 %v2466, %v2470
    %vm2472 = vweird.f32 %v2440
    %vm2473 = vweird.f32 %v2466
    %vm2474 = vmor %vm2472, %vm2473
    %v2475 = vsel %vm2474, %v2466, %v2471
    %v2476 = vrsqrt.pop %v2441
    %v2477 = vmul.f32 %v2476, %v2441
    %v2478 = vmul.f32 %v2477, %v2476
    %v2479 = vmul.f32 0.5, %v2478
    %v2480 = vsub.f32 1.5, %v2479
    %v2481 = vmul.f32 %v2476, %v2480
    %vm2482 = vweird.f32 %v2441
    %vm2483 = vweird.f32 %v2476
    %vm2484 = vmor %vm2482, %vm2483
    %v2485 = vsel %vm2484, %v2476, %v2481
    %v2486 = vrsqrt.pop %v2442
    %v2487 = vmul.f32 %v2486, %v2442
    %v2488 = vmul.f32 %v2487, %v2486
    %v2489 = vmul.f32 0.5, %v2488
    %v2490 = vsub.f32 1.5, %v2489
    %v2491 = vmul.f32 %v2486, %v2490
    %vm2492 = vweird.f32 %v2442
    %vm2493 = vweird.f32 %v2486
    %vm2494 = vmor %vm2492, %vm2493
    %v2495 = vsel %vm2494, %v2486, %v2491
    %v2496 = vrsqrt.pop %v2443
    %v2497 = vmul.f32 %v2496, %v2443
    %v2498 = vmul.f32 %v2497, %v2496
    %v2499 = vmul.f32 0.5, %v2498
    %v2500 = vsub.f32 1.5, %v2499
    %v2501 = vmul.f32 %v2496, %v2500
    %vm2502 = vweird.f32 %v2443
    %vm2503 = vweird.f32 %v2496
    %vm2504 = vmor %vm2502, %vm2503
    %v2505 = vsel %vm2504, %v2496, %v2501
    %v2506 = vrsqrt.pop %v2444
    %v2507 = vmul.f32 %v2506, %v2444
    %v2508 = vmul.f32 %v2507, %v2506
    %v2509 = vmul.f32 0.5, %v2508
    %v2510 = vsub.f32 1.5, %v2509
    %v2511 = vmul.f32 %v2506, %v2510
    %vm2512 = vweird.f32 %v2444
    %vm2513 = vweird.f32 %v2506
    %vm2514 = vmor %vm2512, %vm2513
    %v2515 = vsel %vm2514, %v2506, %v2511
    %v2516 = vrsqrt.pop %v2445
    %v2517 = vmul.f32 %v2516, %v2445
    %v2518 = vmul.f32 %v2517, %v2516
    %v2519 = vmul.f32 0.5, %v2518
    %v2520 = vsub.f32 1.5, %v2519
    %v2521 = vmul.f32 %v2516, %v2520
    %vm2522 = vweird.f32 %v2445
    %vm2523 = vweird.f32 %v2516
    %vm2524 = vmor %vm2522, %vm2523
    %v2525 = vsel %vm2524, %v2516, %v2521
    %v2526 = vmul.f32 %v2278, %v2455
    %v2527 = vmul.f32 %v2279, %v2465
    %v2528 = vmul.f32 %v2280, %v2475
    %v2529 = vmul.f32 %v2281, %v2485
    %v2530 = vmul.f32 %v2282, %v2495
    %v2531 = vmul.f32 %v2283, %v2505
    %v2532 = vmul.f32 %v2284, %v2515
    %v2533 = vmul.f32 %v2285, %v2525
    %v2534 = vmul.f32 %v2334, %v2526
    %v2535 = vmul.f32 %v2335, %v2527
    %v2536 = vmul.f32 %v2336, %v2528
    %v2537 = vmul.f32 %v2337, %v2529
    %v2538 = vmul.f32 %v2338, %v2530
    %v2539 = vmul.f32 %v2339, %v2531
    %v2540 = vmul.f32 %v2340, %v2532
    %v2541 = vmul.f32 %v2341, %v2533
    %v2542 = vsub.f32 %v2286, %v2534
    %v2543 = vsub.f32 %v2287, %v2535
    %v2544 = vsub.f32 %v2288, %v2536
    %v2545 = vsub.f32 %v2289, %v2537
    %v2546 = vsub.f32 %v2290, %v2538
    %v2547 = vsub.f32 %v2291, %v2539
    %v2548 = vsub.f32 %v2292, %v2540
    %v2549 = vsub.f32 %v2293, %v2541
    %2551 = vset.pattern.permute.xlu0 0
    %2552 = vperm.xlu0 %2551, %v2526
    %v2553 = vpop.permute.xlu0 %2552
    %2556 = vset.pattern.permute.xlu0 0
    %2557 = vperm.xlu0 %2556, %v2527
    %v2558 = vpop.permute.xlu0 %2557
    %2561 = vset.pattern.permute.xlu0 0
    %2562 = vperm.xlu0 %2561, %v2528
    %v2563 = vpop.permute.xlu0 %2562
    %2566 = vset.pattern.permute.xlu0 0
    %2567 = vperm.xlu0 %2566, %v2529
    %v2568 = vpop.permute.xlu0 %2567
    %2571 = vset.pattern.permute.xlu0 0
    %2572 = vperm.xlu0 %2571, %v2530
    %v2573 = vpop.permute.xlu0 %2572
    %2576 = vset.pattern.permute.xlu0 0
    %2577 = vperm.xlu0 %2576, %v2531
    %v2578 = vpop.permute.xlu0 %2577
    %2581 = vset.pattern.permute.xlu0 0
    %2582 = vperm.xlu0 %2581, %v2532
    %v2583 = vpop.permute.xlu0 %2582
    %2586 = vset.pattern.permute.xlu0 0
    %2587 = vperm.xlu0 %2586, %v2533
    %v2588 = vpop.permute.xlu0 %2587
    %v2590 = vmul.f32 %v2172, %v2553
    %v2591 = vmul.f32 %v2201, %v2553
    %v2592 = vmul.f32 %v2230, %v2553
    %v2593 = vmul.f32 %v2259, %v2553
    %v2594 = vmul.f32 %v2174, %v2558
    %v2595 = vmul.f32 %v2203, %v2558
    %v2596 = vmul.f32 %v2232, %v2558
    %v2597 = vmul.f32 %v2261, %v2558
    %v2598 = vmul.f32 %v2177, %v2563
    %v2599 = vmul.f32 %v2206, %v2563
    %v2600 = vmul.f32 %v2235, %v2563
    %v2601 = vmul.f32 %v2264, %v2563
    %v2602 = vmul.f32 %v2179, %v2568
    %v2603 = vmul.f32 %v2208, %v2568
    %v2604 = vmul.f32 %v2237, %v2568
    %v2605 = vmul.f32 %v2266, %v2568
    %v2606 = vmul.f32 %v2182, %v2573
    %v2607 = vmul.f32 %v2211, %v2573
    %v2608 = vmul.f32 %v2240, %v2573
    %v2609 = vmul.f32 %v2269, %v2573
    %v2610 = vmul.f32 %v2184, %v2578
    %v2611 = vmul.f32 %v2213, %v2578
    %v2612 = vmul.f32 %v2242, %v2578
    %v2613 = vmul.f32 %v2271, %v2578
    %v2614 = vmul.f32 %v2187, %v2583
    %v2615 = vmul.f32 %v2216, %v2583
    %v2616 = vmul.f32 %v2245, %v2583
    %v2617 = vmul.f32 %v2274, %v2583
    %v2618 = vmul.f32 %v2189, %v2588
    %v2619 = vmul.f32 %v2218, %v2588
    %v2620 = vmul.f32 %v2247, %v2588
    %v2621 = vmul.f32 %v2276, %v2588
    %2623 = vset.pattern.permute.xlu0 0
    %2624 = vperm.xlu0 %2623, %v2542
    %v2625 = vpop.permute.xlu0 %2624
    %2628 = vset.pattern.permute.xlu0 0
    %2629 = vperm.xlu0 %2628, %v2543
    %v2630 = vpop.permute.xlu0 %2629
    %2633 = vset.pattern.permute.xlu0 0
    %2634 = vperm.xlu0 %2633, %v2544
    %v2635 = vpop.permute.xlu0 %2634
    %2638 = vset.pattern.permute.xlu0 0
    %2639 = vperm.xlu0 %2638, %v2545
    %v2640 = vpop.permute.xlu0 %2639
    %2643 = vset.pattern.permute.xlu0 0
    %2644 = vperm.xlu0 %2643, %v2546
    %v2645 = vpop.permute.xlu0 %2644
    %2648 = vset.pattern.permute.xlu0 0
    %2649 = vperm.xlu0 %2648, %v2547
    %v2650 = vpop.permute.xlu0 %2649
    %2653 = vset.pattern.permute.xlu0 0
    %2654 = vperm.xlu0 %2653, %v2548
    %v2655 = vpop.permute.xlu0 %2654
    %2658 = vset.pattern.permute.xlu0 0
    %2659 = vperm.xlu0 %2658, %v2549
    %v2660 = vpop.permute.xlu0 %2659
    %v2662 = vadd.f32 %v2590, %v2625
    %v2663 = vadd.f32 %v2591, %v2625
    %v2664 = vadd.f32 %v2592, %v2625
    %v2665 = vadd.f32 %v2593, %v2625
    %v2666 = vadd.f32 %v2594, %v2630
    %v2667 = vadd.f32 %v2595, %v2630
    %v2668 = vadd.f32 %v2596, %v2630
    %v2669 = vadd.f32 %v2597, %v2630
    %v2670 = vadd.f32 %v2598, %v2635
    %v2671 = vadd.f32 %v2599, %v2635
    %v2672 = vadd.f32 %v2600, %v2635
    %v2673 = vadd.f32 %v2601, %v2635
    %v2674 = vadd.f32 %v2602, %v2640
    %v2675 = vadd.f32 %v2603, %v2640
    %v2676 = vadd.f32 %v2604, %v2640
    %v2677 = vadd.f32 %v2605, %v2640
    %v2678 = vadd.f32 %v2606, %v2645
    %v2679 = vadd.f32 %v2607, %v2645
    %v2680 = vadd.f32 %v2608, %v2645
    %v2681 = vadd.f32 %v2609, %v2645
    %v2682 = vadd.f32 %v2610, %v2650
    %v2683 = vadd.f32 %v2611, %v2650
    %v2684 = vadd.f32 %v2612, %v2650
    %v2685 = vadd.f32 %v2613, %v2650
    %v2686 = vadd.f32 %v2614, %v2655
    %v2687 = vadd.f32 %v2615, %v2655
    %v2688 = vadd.f32 %v2616, %v2655
    %v2689 = vadd.f32 %v2617, %v2655
    %v2690 = vadd.f32 %v2618, %v2660
    %v2691 = vadd.f32 %v2619, %v2660
    %v2692 = vadd.f32 %v2620, %v2660
    %v2693 = vadd.f32 %v2621, %v2660
    %v2694 = vld [vmem:[#allocation3] sm:$0xff]
    %v2695 = vld [vmem:[#allocation3 + $0x8] sm:$0xff]
    %v2696 = vld [vmem:[#allocation3 + $0x10] sm:$0xff]
    %v2697 = vld [vmem:[#allocation3 + $0x18] sm:$0xff]
    %v2698 = vld [vmem:[#allocation3 + $0x20] sm:$0xff]
    %v2699 = vld [vmem:[#allocation3 + $0x28] sm:$0xff]
    %v2700 = vld [vmem:[#allocation3 + $0x30] sm:$0xff]
    %v2701 = vld [vmem:[#allocation3 + $0x38] sm:$0xff]
    %v2702 = vld [vmem:[#allocation3 + $0x40] sm:$0xff]
    %v2703 = vld [vmem:[#allocation3 + $0x48] sm:$0xff]
    %v2704 = vld [vmem:[#allocation3 + $0x50] sm:$0xff]
    %v2705 = vld [vmem:[#allocation3 + $0x58] sm:$0xff]
    %v2706 = vld [vmem:[#allocation3 + $0x60] sm:$0xff]
    %v2707 = vld [vmem:[#allocation3 + $0x68] sm:$0xff]
    %v2708 = vld [vmem:[#allocation3 + $0x70] sm:$0xff]
    %v2709 = vld [vmem:[#allocation3 + $0x78] sm:$0xff]
    %v2710 = vld [vmem:[#allocation3 + $0x80] sm:$0xff]
    %v2711 = vld [vmem:[#allocation3 + $0x88] sm:$0xff]
    %v2712 = vld [vmem:[#allocation3 + $0x90] sm:$0xff]
    %v2713 = vld [vmem:[#allocation3 + $0x98] sm:$0xff]
    %v2714 = vld [vmem:[#allocation3 + $0xa0] sm:$0xff]
    %v2715 = vld [vmem:[#allocation3 + $0xa8] sm:$0xff]
    %v2716 = vld [vmem:[#allocation3 + $0xb0] sm:$0xff]
    %v2717 = vld [vmem:[#allocation3 + $0xb8] sm:$0xff]
    %v2718 = vld [vmem:[#allocation3 + $0xc0] sm:$0xff]
    %v2719 = vld [vmem:[#allocation3 + $0xc8] sm:$0xff]
    %v2720 = vld [vmem:[#allocation3 + $0xd0] sm:$0xff]
    %v2721 = vld [vmem:[#allocation3 + $0xd8] sm:$0xff]
    %v2722 = vld [vmem:[#allocation3 + $0xe0] sm:$0xff]
    %v2723 = vld [vmem:[#allocation3 + $0xe8] sm:$0xff]
    %v2724 = vld [vmem:[#allocation3 + $0xf0] sm:$0xff]
    %v2725 = vld [vmem:[#allocation3 + $0xf8] sm:$0xff]
    %v2726 = vadd.f32 %v2662, %v2694
    %v2727 = vadd.f32 %v2663, %v2695
    %v2728 = vadd.f32 %v2664, %v2696
    %v2729 = vadd.f32 %v2665, %v2697
    %v2730 = vadd.f32 %v2666, %v2698
    %v2731 = vadd.f32 %v2667, %v2699
    %v2732 = vadd.f32 %v2668, %v2700
    %v2733 = vadd.f32 %v2669, %v2701
    %v2734 = vadd.f32 %v2670, %v2702
    %v2735 = vadd.f32 %v2671, %v2703
    %v2736 = vadd.f32 %v2672, %v2704
    %v2737 = vadd.f32 %v2673, %v2705
    %v2738 = vadd.f32 %v2674, %v2706
    %v2739 = vadd.f32 %v2675, %v2707
    %v2740 = vadd.f32 %v2676, %v2708
    %v2741 = vadd.f32 %v2677, %v2709
    %v2742 = vadd.f32 %v2678, %v2710
    %v2743 = vadd.f32 %v2679, %v2711
    %v2744 = vadd.f32 %v2680, %v2712
    %v2745 = vadd.f32 %v2681, %v2713
    %v2746 = vadd.f32 %v2682, %v2714
    %v2747 = vadd.f32 %v2683, %v2715
    %v2748 = vadd.f32 %v2684, %v2716
    %v2749 = vadd.f32 %v2685, %v2717
    %v2750 = vadd.f32 %v2686, %v2718
    %v2751 = vadd.f32 %v2687, %v2719
    %v2752 = vadd.f32 %v2688, %v2720
    %v2753 = vadd.f32 %v2689, %v2721
    %v2754 = vadd.f32 %v2690, %v2722
    %v2755 = vadd.f32 %v2691, %v2723
    %v2756 = vadd.f32 %v2692, %v2724
    %v2757 = vadd.f32 %v2693, %v2725
    %v2758 = vmax.f32 %v2726, 0.0
    %v2759 = vmax.f32 %v2727, 0.0
    %v2760 = vmax.f32 %v2728, 0.0
    %v2761 = vmax.f32 %v2729, 0.0
    %v2762 = vmax.f32 %v2730, 0.0
    %v2763 = vmax.f32 %v2731, 0.0
    %v2764 = vmax.f32 %v2732, 0.0
    %v2765 = vmax.f32 %v2733, 0.0
    %v2766 = vmax.f32 %v2734, 0.0
    %v2767 = vmax.f32 %v2735, 0.0
    %v2768 = vmax.f32 %v2736, 0.0
    %v2769 = vmax.f32 %v2737, 0.0
    %v2770 = vmax.f32 %v2738, 0.0
    %v2771 = vmax.f32 %v2739, 0.0
    %v2772 = vmax.f32 %v2740, 0.0
    %v2773 = vmax.f32 %v2741, 0.0
    %v2774 = vmax.f32 %v2742, 0.0
    %v2775 = vmax.f32 %v2743, 0.0
    %v2776 = vmax.f32 %v2744, 0.0
    %v2777 = vmax.f32 %v2745, 0.0
    %v2778 = vmax.f32 %v2746, 0.0
    %v2779 = vmax.f32 %v2747, 0.0
    %v2780 = vmax.f32 %v2748, 0.0
    %v2781 = vmax.f32 %v2749, 0.0
    %v2782 = vmax.f32 %v2750, 0.0
    %v2783 = vmax.f32 %v2751, 0.0
    %v2784 = vmax.f32 %v2752, 0.0
    %v2785 = vmax.f32 %v2753, 0.0
    %v2786 = vmax.f32 %v2754, 0.0
    %v2787 = vmax.f32 %v2755, 0.0
    %v2788 = vmax.f32 %v2756, 0.0
    %v2789 = vmax.f32 %v2757, 0.0
    %2790 = vst [vmem:[#allocation6] sm:$0xff] %v2758
    %2791 = vst [vmem:[#allocation6 + $0x8] sm:$0xff] %v2759
    %2792 = vst [vmem:[#allocation6 + $0x10] sm:$0xff] %v2760
    %2793 = vst [vmem:[#allocation6 + $0x18] sm:$0xff] %v2761
    %2794 = vst [vmem:[#allocation6 + $0x20] sm:$0xff] %v2762
    %2795 = vst [vmem:[#allocation6 + $0x28] sm:$0xff] %v2763
    %2796 = vst [vmem:[#allocation6 + $0x30] sm:$0xff] %v2764
    %2797 = vst [vmem:[#allocation6 + $0x38] sm:$0xff] %v2765
    %2798 = vst [vmem:[#allocation6 + $0x40] sm:$0xff] %v2766
    %2799 = vst [vmem:[#allocation6 + $0x48] sm:$0xff] %v2767
    %2800 = vst [vmem:[#allocation6 + $0x50] sm:$0xff] %v2768
    %2801 = vst [vmem:[#allocation6 + $0x58] sm:$0xff] %v2769
    %2802 = vst [vmem:[#allocation6 + $0x60] sm:$0xff] %v2770
    %2803 = vst [vmem:[#allocation6 + $0x68] sm:$0xff] %v2771
    %2804 = vst [vmem:[#allocation6 + $0x70] sm:$0xff] %v2772
    %2805 = vst [vmem:[#allocation6 + $0x78] sm:$0xff] %v2773
    %2806 = vst [vmem:[#allocation6 + $0x80] sm:$0xff] %v2774
    %2807 = vst [vmem:[#allocation6 + $0x88] sm:$0xff] %v2775
    %2808 = vst [vmem:[#allocation6 + $0x90] sm:$0xff] %v2776
    %2809 = vst [vmem:[#allocation6 + $0x98] sm:$0xff] %v2777
    %2810 = vst [vmem:[#allocation6 + $0xa0] sm:$0xff] %v2778
    %2811 = vst [vmem:[#allocation6 + $0xa8] sm:$0xff] %v2779
    %2812 = vst [vmem:[#allocation6 + $0xb0] sm:$0xff] %v2780
    %2813 = vst [vmem:[#allocation6 + $0xb8] sm:$0xff] %v2781
    %2814 = vst [vmem:[#allocation6 + $0xc0] sm:$0xff] %v2782
    %2815 = vst [vmem:[#allocation6 + $0xc8] sm:$0xff] %v2783
    %2816 = vst [vmem:[#allocation6 + $0xd0] sm:$0xff] %v2784
    %2817 = vst [vmem:[#allocation6 + $0xd8] sm:$0xff] %v2785
    %2818 = vst [vmem:[#allocation6 + $0xe0] sm:$0xff] %v2786
    %2819 = vst [vmem:[#allocation6 + $0xe8] sm:$0xff] %v2787
    %2820 = vst [vmem:[#allocation6 + $0xf0] sm:$0xff] %v2788
    %2821 = vst [vmem:[#allocation6 + $0xf8] sm:$0xff] %v2789
    // Predicated region
    $region50: #{tpu_custom_call.1} parent=1 // pred_check
      _
    $region51: #{tpu_custom_call.1} parent=1 // pred_check_branch
      %2823 = sbr.rel (0) target = $region53
    $region52: #{tpu_custom_call.1} parent=1 // pred_region
      %2825 = vsyncadd [#allocation5], 0
      %s2826 = sshll.u32 [#allocation6], 4
      %s2827 = int_to_ptr.vmem [resolvable:$true] %s2826
      %s2828 = sshll.u32 %s11, 4
      %s2829 = int_to_ptr.hbm [resolvable:$true] %s2828
      %2834 = dma.vmem_to_hbm [thread:$0]  %s2827, 4096, %s2829, [#allocation5], 512, 512, 32
    $region53: #{tpu_custom_call.1} parent=1 // pred_fallthru
      _
    // Predicated region
    $region54: #{tpu_custom_call.1} parent=1 // pred_check
      _
    $region55: #{tpu_custom_call.1} parent=1 // pred_check_branch
      %2836 = sbr.rel (0) target = $region57
    $region56: #{tpu_custom_call.1} parent=1 // pred_region
      %2838 = dma.done [#allocation5], 4096
    $region57: #{tpu_custom_call.1} parent=1 // pred_fallthru
      _
    %2839 = vsyncpa [#allocation4], 1
    %2840 = vsyncpa [#allocation5], 1

</llo_original>
